<compile_context>
chip_gen: v6e
topology: v6e:2x2x1
jax: 0.10.0
libtpu: 0.0.40
codegen_flags: <defaults>
</compile_context>

<pallas_src>
import functools
import math

import jax
import jax.numpy as jnp
from jax.experimental import pallas as pl
from jax.experimental.pallas import tpu as pltpu


def _mha_kernel(q_ref, k_ref, v_ref, mask_ref,
                wq_ref, wk_ref, wv_ref, wo_ref,
                o_ref, *, num_heads, d_k, scale):
    # q/k/v_ref: (1, S, d_model) VMEM tile for batch b
    # mask_ref:  (1, S, S) int32 (1 = keep, 0 = mask out)
    # w*_ref:    (d_model, d_model) resident weights ([in, out] layout)
    # o_ref:     (1, S, d_model)
    cdt = q_ref.dtype                      # matmul operand dtype (f32 or bf16)

    q = q_ref[0]                           # (S, d_model)
    k = k_ref[0]
    v = v_ref[0]
    mask = mask_ref[0]                     # (S, S)

    # Projections (MXU), f32 accumulation, operands kept in input dtype.
    Q = jnp.dot(q, wq_ref[...], preferred_element_type=jnp.float32).astype(cdt)
    K = jnp.dot(k, wk_ref[...], preferred_element_type=jnp.float32).astype(cdt)
    V = jnp.dot(v, wv_ref[...], preferred_element_type=jnp.float32).astype(cdt)

    neg = jnp.float32(-1e9)                # scores are f32 (PyTorch f32 branch)

    ctx_heads = []
    for j in range(num_heads):             # static, small head count
        lo = j * d_k
        Qj = Q[:, lo:lo + d_k]             # (S, d_k) lane slices of a value
        Kj = K[:, lo:lo + d_k]
        Vj = V[:, lo:lo + d_k]

        # scores_j = Q_j K_j^T / sqrt(d_k), f32 accumulation on the MXU.
        s = jnp.einsum("qd,kd->qk", Qj, Kj,
                       preferred_element_type=jnp.float32) * scale
        s = jnp.where(mask == 0, neg, s)

        # Exact softmax in f32 (no approx reciprocal -> matches reference).
        m = jnp.max(s, axis=-1, keepdims=True)
        e = jnp.exp(s - m)
        p = e / jnp.sum(e, axis=-1, keepdims=True)
        # dropout == identity (inference)

        ctx_heads.append(
            jnp.dot(p.astype(cdt), Vj, preferred_element_type=jnp.float32))

    ctx = jnp.concatenate(ctx_heads, axis=-1)          # (S, d_model) f32

    out = jnp.dot(ctx.astype(wo_ref.dtype), wo_ref[...],
                  preferred_element_type=jnp.float32)
    o_ref[0] = out.astype(o_ref.dtype)


@functools.partial(jax.jit, static_argnames=("num_heads",))
def multi_head_attention_block(q, k, v, mask, wq, wk, wv, wo, *, num_heads):
    """q, k, v: [B, S, d_model]; mask broadcastable to [B, 1, S, S] (or None)."""
    B, S, d_model = q.shape
    assert d_model % num_heads == 0, "`d_model` must be divisible by `num_heads`"
    d_k = d_model // num_heads
    scale = 1.0 / math.sqrt(d_k)

    # Normalize the mask to a per-batch (B, S, S) int32 tensor (1 keep, 0 drop).
    # TODO(synk): per-head masks (shape [B, h, S, S]) are not supported here.
    if mask is None:
        mask3 = jnp.ones((B, S, S), jnp.int32)
    else:
        m = jnp.asarray(mask)
        if m.ndim == 4:
            m = m[:, 0]                    # drop the (broadcast) head axis
        mask3 = jnp.broadcast_to(m, (B, S, S)).astype(jnp.int32)

    kernel = functools.partial(_mha_kernel, num_heads=num_heads, d_k=d_k,
                               scale=scale)

    grid = (B,)
    out = pl.pallas_call(
        kernel,
        out_shape=jax.ShapeDtypeStruct((B, S, d_model), q.dtype),
        grid_spec=pltpu.PrefetchScalarGridSpec(
            num_scalar_prefetch=0,
            grid=grid,
            in_specs=[
                pl.BlockSpec((1, S, d_model), lambda b: (b, 0, 0)),   # q
                pl.BlockSpec((1, S, d_model), lambda b: (b, 0, 0)),   # k
                pl.BlockSpec((1, S, d_model), lambda b: (b, 0, 0)),   # v
                pl.BlockSpec((1, S, S), lambda b: (b, 0, 0)),         # mask
                # Weights: constant block index -> fetched once, VMEM-resident.
                pl.BlockSpec((d_model, d_model), lambda b: (0, 0)),   # Wq
                pl.BlockSpec((d_model, d_model), lambda b: (0, 0)),   # Wk
                pl.BlockSpec((d_model, d_model), lambda b: (0, 0)),   # Wv
                pl.BlockSpec((d_model, d_model), lambda b: (0, 0)),   # Wo
            ],
            out_specs=pl.BlockSpec((1, S, d_model), lambda b: (b, 0, 0)),
        ),
        compiler_params=pltpu.CompilerParams(
            dimension_semantics=("parallel",),       # megacore: split batch
            vmem_limit_bytes=32 * 1024 * 1024,       # room for resident weights
        ),
    )(q, k, v, mask3, wq, wk, wv, wo)

    return out


def _init_params(key, d_model, dtype=jnp.float32):
    """nn.Linear-style init (uniform +/- 1/sqrt(fan_in)), stored as [in, out]."""
    ks = jax.random.split(key, 4)
    bound = 1.0 / math.sqrt(d_model)
    mk = lambda kk: jax.random.uniform(kk, (d_model, d_model), dtype, -bound, bound)
    return mk(ks[0]), mk(ks[1]), mk(ks[2]), mk(ks[3])


def _reference(q, k, v, mask, wq, wk, wv, wo, num_heads):
    B, S, d_model = q.shape
    d_k = d_model // num_heads

    def split(x):
        return x.reshape(B, S, num_heads, d_k).transpose(0, 2, 1, 3)  # (B,h,S,dk)

    Q, K, V = split(q @ wq), split(k @ wk), split(v @ wv)
    s = jnp.einsum("bhqd,bhkd->bhqk", Q, K) / math.sqrt(d_k)
    s = jnp.where(mask == 0, -1e9, s)                 # mask broadcast (B|1,1,S,S)
    p = jax.nn.softmax(s, axis=-1)
    x = jnp.einsum("bhqk,bhkd->bhqd", p, V)
    x = x.transpose(0, 2, 1, 3).reshape(B, S, d_model)
    return x @ wo


if __name__ == "__main__":
    B, S, d_model, num_heads = 2, 16, 128, 8          # d_k = 16

    key = jax.random.PRNGKey(0)
    kq, kk, kv, kp = jax.random.split(key, 4)
    q = jax.random.normal(kq, (B, S, d_model), jnp.float32)
    k = jax.random.normal(kk, (B, S, d_model), jnp.float32)
    v = jax.random.normal(kv, (B, S, d_model), jnp.float32)
    wq, wk_, wv, wo = _init_params(kp, d_model)

    # Causal mask, PyTorch-style broadcast shape (1, 1, S, S).
    mask = jnp.tril(jnp.ones((S, S), jnp.int32))[None, None]

    y = multi_head_attention_block(q, k, v, mask, wq, wk_, wv, wo,
                                   num_heads=num_heads)
    y = jax.block_until_ready(y)

    y_ref = _reference(q, k, v, mask, wq, wk_, wv, wo, num_heads)
    assert y.shape == (B, S, d_model)
    assert jnp.allclose(y, y_ref, atol=5e-3, rtol=5e-3), "mismatch vs reference"

    print("KERNEL_OK")
</pallas_src>

<mosaic_0001>
module attributes {stable_mosaic.version = 11 : i64} {
  func.func @_mha_kernel(%arg0: i32, %arg1: memref<1x16x128xf32, #tpu.memory_space<vmem>>, %arg2: memref<1x16x128xf32, #tpu.memory_space<vmem>>, %arg3: memref<1x16x128xf32, #tpu.memory_space<vmem>>, %arg4: memref<1x16x16xi32, #tpu.memory_space<vmem>>, %arg5: memref<128x128xf32, #tpu.memory_space<vmem>>, %arg6: memref<128x128xf32, #tpu.memory_space<vmem>>, %arg7: memref<128x128xf32, #tpu.memory_space<vmem>>, %arg8: memref<128x128xf32, #tpu.memory_space<vmem>>, %arg9: memref<1x16x128xf32, #tpu.memory_space<vmem>>) attributes {dimension_semantics = [#tpu.dimension_semantics<parallel>], iteration_bounds = array<i64: 2>, scalar_prefetch = 0 : i64, scratch_operands = 0 : i64, tpu.core_type = #tpu.core_type<tc>, window_params = [{transform_indices = @transform_0, window_bounds = array<i64: 1, 16, 128>}, {transform_indices = @transform_1, window_bounds = array<i64: 1, 16, 128>}, {transform_indices = @transform_2, window_bounds = array<i64: 1, 16, 128>}, {transform_indices = @transform_3, window_bounds = array<i64: 1, 16, 16>}, {pipeline_mode = #tpu.pipeline_mode<synchronous>, transform_indices = @transform_4, window_bounds = array<i64: 128, 128>}, {pipeline_mode = #tpu.pipeline_mode<synchronous>, transform_indices = @transform_5, window_bounds = array<i64: 128, 128>}, {pipeline_mode = #tpu.pipeline_mode<synchronous>, transform_indices = @transform_6, window_bounds = array<i64: 128, 128>}, {pipeline_mode = #tpu.pipeline_mode<synchronous>, transform_indices = @transform_7, window_bounds = array<i64: 128, 128>}, {transform_indices = @transform_8, window_bounds = array<i64: 1, 16, 128>}]} {
    %c0 = arith.constant 0 : index
    %c0_0 = arith.constant 0 : index
    %c0_1 = arith.constant 0 : index
    %0 = vector.load %arg1[%c0, %c0_0, %c0_1] : memref<1x16x128xf32, #tpu.memory_space<vmem>>, vector<1x16x128xf32>
    %1 = vector.shape_cast %0 : vector<1x16x128xf32> to vector<16x128xf32>
    %c0_2 = arith.constant 0 : index
    %c0_3 = arith.constant 0 : index
    %c0_4 = arith.constant 0 : index
    %2 = vector.load %arg2[%c0_2, %c0_3, %c0_4] : memref<1x16x128xf32, #tpu.memory_space<vmem>>, vector<1x16x128xf32>
    %3 = vector.shape_cast %2 : vector<1x16x128xf32> to vector<16x128xf32>
    %c0_5 = arith.constant 0 : index
    %c0_6 = arith.constant 0 : index
    %c0_7 = arith.constant 0 : index
    %4 = vector.load %arg3[%c0_5, %c0_6, %c0_7] : memref<1x16x128xf32, #tpu.memory_space<vmem>>, vector<1x16x128xf32>
    %5 = vector.shape_cast %4 : vector<1x16x128xf32> to vector<16x128xf32>
    %c0_8 = arith.constant 0 : index
    %c0_9 = arith.constant 0 : index
    %c0_10 = arith.constant 0 : index
    %6 = vector.load %arg4[%c0_8, %c0_9, %c0_10] : memref<1x16x16xi32, #tpu.memory_space<vmem>>, vector<1x16x16xi32>
    %7 = vector.shape_cast %6 : vector<1x16x16xi32> to vector<16x16xi32>
    %c0_11 = arith.constant 0 : index
    %c0_12 = arith.constant 0 : index
    %8 = vector.load %arg5[%c0_11, %c0_12] : memref<128x128xf32, #tpu.memory_space<vmem>>, vector<128x128xf32>
    %cst = arith.constant dense<0.000000e+00> : vector<16x128xf32>
    %9 = tpu.matmul %1, %8, %cst {dimension_numbers = #tpu.dot_dimension_numbers<[1], [0], [0], [1], [0, 0, 1, 1], [], []>} : vector<16x128xf32>, vector<128x128xf32>, vector<16x128xf32> -> vector<16x128xf32>
    %c0_13 = arith.constant 0 : index
    %c0_14 = arith.constant 0 : index
    %10 = vector.load %arg6[%c0_13, %c0_14] : memref<128x128xf32, #tpu.memory_space<vmem>>, vector<128x128xf32>
    %cst_15 = arith.constant dense<0.000000e+00> : vector<16x128xf32>
    %11 = tpu.matmul %3, %10, %cst_15 {dimension_numbers = #tpu.dot_dimension_numbers<[1], [0], [0], [1], [0, 0, 1, 1], [], []>} : vector<16x128xf32>, vector<128x128xf32>, vector<16x128xf32> -> vector<16x128xf32>
    %c0_16 = arith.constant 0 : index
    %c0_17 = arith.constant 0 : index
    %12 = vector.load %arg7[%c0_16, %c0_17] : memref<128x128xf32, #tpu.memory_space<vmem>>, vector<128x128xf32>
    %cst_18 = arith.constant dense<0.000000e+00> : vector<16x128xf32>
    %13 = tpu.matmul %5, %12, %cst_18 {dimension_numbers = #tpu.dot_dimension_numbers<[1], [0], [0], [1], [0, 0, 1, 1], [], []>} : vector<16x128xf32>, vector<128x128xf32>, vector<16x128xf32> -> vector<16x128xf32>
    %14 = vector.extract_strided_slice %9 {offsets = [0, 0], sizes = [16, 16], strides = [1, 1]} : vector<16x128xf32> to vector<16x16xf32>
    %15 = vector.extract_strided_slice %11 {offsets = [0, 0], sizes = [16, 16], strides = [1, 1]} : vector<16x128xf32> to vector<16x16xf32>
    %16 = vector.extract_strided_slice %13 {offsets = [0, 0], sizes = [16, 16], strides = [1, 1]} : vector<16x128xf32> to vector<16x16xf32>
    "tpu.trace_start"() <{level = 10 : i32, message = "qd,kd->qk"}> : () -> ()
    %cst_19 = arith.constant dense<0.000000e+00> : vector<16x16xf32>
    %17 = tpu.matmul %14, %15, %cst_19 {dimension_numbers = #tpu.dot_dimension_numbers<[1], [1], [0], [0], [0, 0, 1, 0], [], []>} : vector<16x16xf32>, vector<16x16xf32>, vector<16x16xf32> -> vector<16x16xf32>
    "tpu.trace_stop"() : () -> ()
    %cst_20 = arith.constant 2.500000e-01 : f32
    %18 = vector.broadcast %cst_20 : f32 to vector<16x16xf32>
    %19 = arith.mulf %17, %18 : vector<16x16xf32>
    %c0_i32 = arith.constant 0 : i32
    %20 = vector.broadcast %c0_i32 : i32 to vector<16x16xi32>
    %21 = arith.cmpi eq, %7, %20 : vector<16x16xi32>
    %cst_21 = arith.constant -1.000000e+09 : f32
    %22 = vector.broadcast %cst_21 : f32 to vector<16x16xf32>
    %23 = arith.select %21, %22, %19 : vector<16x16xi1>, vector<16x16xf32>
    %cst_22 = arith.constant dense<0xFF800000> : vector<16xf32>
    %24 = vector.multi_reduction <maximumf>, %23, %cst_22 [1] : vector<16x16xf32> to vector<16xf32>
    %25 = vector.shape_cast %24 : vector<16xf32> to vector<16x1xf32>
    %26 = vector.broadcast %25 : vector<16x1xf32> to vector<16x16xf32>
    %27 = arith.subf %23, %26 : vector<16x16xf32>
    %28 = math.exp %27 : vector<16x16xf32>
    %cst_23 = arith.constant dense<0.000000e+00> : vector<16xf32>
    %29 = vector.multi_reduction <add>, %28, %cst_23 [1] : vector<16x16xf32> to vector<16xf32>
    %30 = vector.shape_cast %29 : vector<16xf32> to vector<16x1xf32>
    %31 = vector.broadcast %30 : vector<16x1xf32> to vector<16x16xf32>
    %32 = arith.divf %28, %31 : vector<16x16xf32>
    %cst_24 = arith.constant dense<0.000000e+00> : vector<16x16xf32>
    %33 = tpu.matmul %32, %16, %cst_24 {dimension_numbers = #tpu.dot_dimension_numbers<[1], [0], [0], [1], [0, 0, 1, 1], [], []>} : vector<16x16xf32>, vector<16x16xf32>, vector<16x16xf32> -> vector<16x16xf32>
    %34 = vector.extract_strided_slice %9 {offsets = [0, 16], sizes = [16, 16], strides = [1, 1]} : vector<16x128xf32> to vector<16x16xf32>
    %35 = vector.extract_strided_slice %11 {offsets = [0, 16], sizes = [16, 16], strides = [1, 1]} : vector<16x128xf32> to vector<16x16xf32>
    %36 = vector.extract_strided_slice %13 {offsets = [0, 16], sizes = [16, 16], strides = [1, 1]} : vector<16x128xf32> to vector<16x16xf32>
    "tpu.trace_start"() <{level = 10 : i32, message = "qd,kd->qk"}> : () -> ()
    %cst_25 = arith.constant dense<0.000000e+00> : vector<16x16xf32>
    %37 = tpu.matmul %34, %35, %cst_25 {dimension_numbers = #tpu.dot_dimension_numbers<[1], [1], [0], [0], [0, 0, 1, 0], [], []>} : vector<16x16xf32>, vector<16x16xf32>, vector<16x16xf32> -> vector<16x16xf32>
    "tpu.trace_stop"() : () -> ()
    %cst_26 = arith.constant 2.500000e-01 : f32
    %38 = vector.broadcast %cst_26 : f32 to vector<16x16xf32>
    %39 = arith.mulf %37, %38 : vector<16x16xf32>
    %c0_i32_27 = arith.constant 0 : i32
    %40 = vector.broadcast %c0_i32_27 : i32 to vector<16x16xi32>
    %41 = arith.cmpi eq, %7, %40 : vector<16x16xi32>
    %cst_28 = arith.constant -1.000000e+09 : f32
    %42 = vector.broadcast %cst_28 : f32 to vector<16x16xf32>
    %43 = arith.select %41, %42, %39 : vector<16x16xi1>, vector<16x16xf32>
    %cst_29 = arith.constant dense<0xFF800000> : vector<16xf32>
    %44 = vector.multi_reduction <maximumf>, %43, %cst_29 [1] : vector<16x16xf32> to vector<16xf32>
    %45 = vector.shape_cast %44 : vector<16xf32> to vector<16x1xf32>
    %46 = vector.broadcast %45 : vector<16x1xf32> to vector<16x16xf32>
    %47 = arith.subf %43, %46 : vector<16x16xf32>
    %48 = math.exp %47 : vector<16x16xf32>
    %cst_30 = arith.constant dense<0.000000e+00> : vector<16xf32>
    %49 = vector.multi_reduction <add>, %48, %cst_30 [1] : vector<16x16xf32> to vector<16xf32>
    %50 = vector.shape_cast %49 : vector<16xf32> to vector<16x1xf32>
    %51 = vector.broadcast %50 : vector<16x1xf32> to vector<16x16xf32>
    %52 = arith.divf %48, %51 : vector<16x16xf32>
    %cst_31 = arith.constant dense<0.000000e+00> : vector<16x16xf32>
    %53 = tpu.matmul %52, %36, %cst_31 {dimension_numbers = #tpu.dot_dimension_numbers<[1], [0], [0], [1], [0, 0, 1, 1], [], []>} : vector<16x16xf32>, vector<16x16xf32>, vector<16x16xf32> -> vector<16x16xf32>
    %54 = vector.extract_strided_slice %9 {offsets = [0, 32], sizes = [16, 16], strides = [1, 1]} : vector<16x128xf32> to vector<16x16xf32>
    %55 = vector.extract_strided_slice %11 {offsets = [0, 32], sizes = [16, 16], strides = [1, 1]} : vector<16x128xf32> to vector<16x16xf32>
    %56 = vector.extract_strided_slice %13 {offsets = [0, 32], sizes = [16, 16], strides = [1, 1]} : vector<16x128xf32> to vector<16x16xf32>
    "tpu.trace_start"() <{level = 10 : i32, message = "qd,kd->qk"}> : () -> ()
    %cst_32 = arith.constant dense<0.000000e+00> : vector<16x16xf32>
    %57 = tpu.matmul %54, %55, %cst_32 {dimension_numbers = #tpu.dot_dimension_numbers<[1], [1], [0], [0], [0, 0, 1, 0], [], []>} : vector<16x16xf32>, vector<16x16xf32>, vector<16x16xf32> -> vector<16x16xf32>
    "tpu.trace_stop"() : () -> ()
    %cst_33 = arith.constant 2.500000e-01 : f32
    %58 = vector.broadcast %cst_33 : f32 to vector<16x16xf32>
    %59 = arith.mulf %57, %58 : vector<16x16xf32>
    %c0_i32_34 = arith.constant 0 : i32
    %60 = vector.broadcast %c0_i32_34 : i32 to vector<16x16xi32>
    %61 = arith.cmpi eq, %7, %60 : vector<16x16xi32>
    %cst_35 = arith.constant -1.000000e+09 : f32
    %62 = vector.broadcast %cst_35 : f32 to vector<16x16xf32>
    %63 = arith.select %61, %62, %59 : vector<16x16xi1>, vector<16x16xf32>
    %cst_36 = arith.constant dense<0xFF800000> : vector<16xf32>
    %64 = vector.multi_reduction <maximumf>, %63, %cst_36 [1] : vector<16x16xf32> to vector<16xf32>
    %65 = vector.shape_cast %64 : vector<16xf32> to vector<16x1xf32>
    %66 = vector.broadcast %65 : vector<16x1xf32> to vector<16x16xf32>
    %67 = arith.subf %63, %66 : vector<16x16xf32>
    %68 = math.exp %67 : vector<16x16xf32>
    %cst_37 = arith.constant dense<0.000000e+00> : vector<16xf32>
    %69 = vector.multi_reduction <add>, %68, %cst_37 [1] : vector<16x16xf32> to vector<16xf32>
    %70 = vector.shape_cast %69 : vector<16xf32> to vector<16x1xf32>
    %71 = vector.broadcast %70 : vector<16x1xf32> to vector<16x16xf32>
    %72 = arith.divf %68, %71 : vector<16x16xf32>
    %cst_38 = arith.constant dense<0.000000e+00> : vector<16x16xf32>
    %73 = tpu.matmul %72, %56, %cst_38 {dimension_numbers = #tpu.dot_dimension_numbers<[1], [0], [0], [1], [0, 0, 1, 1], [], []>} : vector<16x16xf32>, vector<16x16xf32>, vector<16x16xf32> -> vector<16x16xf32>
    %74 = vector.extract_strided_slice %9 {offsets = [0, 48], sizes = [16, 16], strides = [1, 1]} : vector<16x128xf32> to vector<16x16xf32>
    %75 = vector.extract_strided_slice %11 {offsets = [0, 48], sizes = [16, 16], strides = [1, 1]} : vector<16x128xf32> to vector<16x16xf32>
    %76 = vector.extract_strided_slice %13 {offsets = [0, 48], sizes = [16, 16], strides = [1, 1]} : vector<16x128xf32> to vector<16x16xf32>
    "tpu.trace_start"() <{level = 10 : i32, message = "qd,kd->qk"}> : () -> ()
    %cst_39 = arith.constant dense<0.000000e+00> : vector<16x16xf32>
    %77 = tpu.matmul %74, %75, %cst_39 {dimension_numbers = #tpu.dot_dimension_numbers<[1], [1], [0], [0], [0, 0, 1, 0], [], []>} : vector<16x16xf32>, vector<16x16xf32>, vector<16x16xf32> -> vector<16x16xf32>
    "tpu.trace_stop"() : () -> ()
    %cst_40 = arith.constant 2.500000e-01 : f32
    %78 = vector.broadcast %cst_40 : f32 to vector<16x16xf32>
    %79 = arith.mulf %77, %78 : vector<16x16xf32>
    %c0_i32_41 = arith.constant 0 : i32
    %80 = vector.broadcast %c0_i32_41 : i32 to vector<16x16xi32>
    %81 = arith.cmpi eq, %7, %80 : vector<16x16xi32>
    %cst_42 = arith.constant -1.000000e+09 : f32
    %82 = vector.broadcast %cst_42 : f32 to vector<16x16xf32>
    %83 = arith.select %81, %82, %79 : vector<16x16xi1>, vector<16x16xf32>
    %cst_43 = arith.constant dense<0xFF800000> : vector<16xf32>
    %84 = vector.multi_reduction <maximumf>, %83, %cst_43 [1] : vector<16x16xf32> to vector<16xf32>
    %85 = vector.shape_cast %84 : vector<16xf32> to vector<16x1xf32>
    %86 = vector.broadcast %85 : vector<16x1xf32> to vector<16x16xf32>
    %87 = arith.subf %83, %86 : vector<16x16xf32>
    %88 = math.exp %87 : vector<16x16xf32>
    %cst_44 = arith.constant dense<0.000000e+00> : vector<16xf32>
    %89 = vector.multi_reduction <add>, %88, %cst_44 [1] : vector<16x16xf32> to vector<16xf32>
    %90 = vector.shape_cast %89 : vector<16xf32> to vector<16x1xf32>
    %91 = vector.broadcast %90 : vector<16x1xf32> to vector<16x16xf32>
    %92 = arith.divf %88, %91 : vector<16x16xf32>
    %cst_45 = arith.constant dense<0.000000e+00> : vector<16x16xf32>
    %93 = tpu.matmul %92, %76, %cst_45 {dimension_numbers = #tpu.dot_dimension_numbers<[1], [0], [0], [1], [0, 0, 1, 1], [], []>} : vector<16x16xf32>, vector<16x16xf32>, vector<16x16xf32> -> vector<16x16xf32>
    %94 = vector.extract_strided_slice %9 {offsets = [0, 64], sizes = [16, 16], strides = [1, 1]} : vector<16x128xf32> to vector<16x16xf32>
    %95 = vector.extract_strided_slice %11 {offsets = [0, 64], sizes = [16, 16], strides = [1, 1]} : vector<16x128xf32> to vector<16x16xf32>
    %96 = vector.extract_strided_slice %13 {offsets = [0, 64], sizes = [16, 16], strides = [1, 1]} : vector<16x128xf32> to vector<16x16xf32>
    "tpu.trace_start"() <{level = 10 : i32, message = "qd,kd->qk"}> : () -> ()
    %cst_46 = arith.constant dense<0.000000e+00> : vector<16x16xf32>
    %97 = tpu.matmul %94, %95, %cst_46 {dimension_numbers = #tpu.dot_dimension_numbers<[1], [1], [0], [0], [0, 0, 1, 0], [], []>} : vector<16x16xf32>, vector<16x16xf32>, vector<16x16xf32> -> vector<16x16xf32>
    "tpu.trace_stop"() : () -> ()
    %cst_47 = arith.constant 2.500000e-01 : f32
    %98 = vector.broadcast %cst_47 : f32 to vector<16x16xf32>
    %99 = arith.mulf %97, %98 : vector<16x16xf32>
    %c0_i32_48 = arith.constant 0 : i32
    %100 = vector.broadcast %c0_i32_48 : i32 to vector<16x16xi32>
    %101 = arith.cmpi eq, %7, %100 : vector<16x16xi32>
    %cst_49 = arith.constant -1.000000e+09 : f32
    %102 = vector.broadcast %cst_49 : f32 to vector<16x16xf32>
    %103 = arith.select %101, %102, %99 : vector<16x16xi1>, vector<16x16xf32>
    %cst_50 = arith.constant dense<0xFF800000> : vector<16xf32>
    %104 = vector.multi_reduction <maximumf>, %103, %cst_50 [1] : vector<16x16xf32> to vector<16xf32>
    %105 = vector.shape_cast %104 : vector<16xf32> to vector<16x1xf32>
    %106 = vector.broadcast %105 : vector<16x1xf32> to vector<16x16xf32>
    %107 = arith.subf %103, %106 : vector<16x16xf32>
    %108 = math.exp %107 : vector<16x16xf32>
    %cst_51 = arith.constant dense<0.000000e+00> : vector<16xf32>
    %109 = vector.multi_reduction <add>, %108, %cst_51 [1] : vector<16x16xf32> to vector<16xf32>
    %110 = vector.shape_cast %109 : vector<16xf32> to vector<16x1xf32>
    %111 = vector.broadcast %110 : vector<16x1xf32> to vector<16x16xf32>
    %112 = arith.divf %108, %111 : vector<16x16xf32>
    %cst_52 = arith.constant dense<0.000000e+00> : vector<16x16xf32>
    %113 = tpu.matmul %112, %96, %cst_52 {dimension_numbers = #tpu.dot_dimension_numbers<[1], [0], [0], [1], [0, 0, 1, 1], [], []>} : vector<16x16xf32>, vector<16x16xf32>, vector<16x16xf32> -> vector<16x16xf32>
    %114 = vector.extract_strided_slice %9 {offsets = [0, 80], sizes = [16, 16], strides = [1, 1]} : vector<16x128xf32> to vector<16x16xf32>
    %115 = vector.extract_strided_slice %11 {offsets = [0, 80], sizes = [16, 16], strides = [1, 1]} : vector<16x128xf32> to vector<16x16xf32>
    %116 = vector.extract_strided_slice %13 {offsets = [0, 80], sizes = [16, 16], strides = [1, 1]} : vector<16x128xf32> to vector<16x16xf32>
    "tpu.trace_start"() <{level = 10 : i32, message = "qd,kd->qk"}> : () -> ()
    %cst_53 = arith.constant dense<0.000000e+00> : vector<16x16xf32>
    %117 = tpu.matmul %114, %115, %cst_53 {dimension_numbers = #tpu.dot_dimension_numbers<[1], [1], [0], [0], [0, 0, 1, 0], [], []>} : vector<16x16xf32>, vector<16x16xf32>, vector<16x16xf32> -> vector<16x16xf32>
    "tpu.trace_stop"() : () -> ()
    %cst_54 = arith.constant 2.500000e-01 : f32
    %118 = vector.broadcast %cst_54 : f32 to vector<16x16xf32>
    %119 = arith.mulf %117, %118 : vector<16x16xf32>
    %c0_i32_55 = arith.constant 0 : i32
    %120 = vector.broadcast %c0_i32_55 : i32 to vector<16x16xi32>
    %121 = arith.cmpi eq, %7, %120 : vector<16x16xi32>
    %cst_56 = arith.constant -1.000000e+09 : f32
    %122 = vector.broadcast %cst_56 : f32 to vector<16x16xf32>
    %123 = arith.select %121, %122, %119 : vector<16x16xi1>, vector<16x16xf32>
    %cst_57 = arith.constant dense<0xFF800000> : vector<16xf32>
    %124 = vector.multi_reduction <maximumf>, %123, %cst_57 [1] : vector<16x16xf32> to vector<16xf32>
    %125 = vector.shape_cast %124 : vector<16xf32> to vector<16x1xf32>
    %126 = vector.broadcast %125 : vector<16x1xf32> to vector<16x16xf32>
    %127 = arith.subf %123, %126 : vector<16x16xf32>
    %128 = math.exp %127 : vector<16x16xf32>
    %cst_58 = arith.constant dense<0.000000e+00> : vector<16xf32>
    %129 = vector.multi_reduction <add>, %128, %cst_58 [1] : vector<16x16xf32> to vector<16xf32>
    %130 = vector.shape_cast %129 : vector<16xf32> to vector<16x1xf32>
    %131 = vector.broadcast %130 : vector<16x1xf32> to vector<16x16xf32>
    %132 = arith.divf %128, %131 : vector<16x16xf32>
    %cst_59 = arith.constant dense<0.000000e+00> : vector<16x16xf32>
    %133 = tpu.matmul %132, %116, %cst_59 {dimension_numbers = #tpu.dot_dimension_numbers<[1], [0], [0], [1], [0, 0, 1, 1], [], []>} : vector<16x16xf32>, vector<16x16xf32>, vector<16x16xf32> -> vector<16x16xf32>
    %134 = vector.extract_strided_slice %9 {offsets = [0, 96], sizes = [16, 16], strides = [1, 1]} : vector<16x128xf32> to vector<16x16xf32>
    %135 = vector.extract_strided_slice %11 {offsets = [0, 96], sizes = [16, 16], strides = [1, 1]} : vector<16x128xf32> to vector<16x16xf32>
    %136 = vector.extract_strided_slice %13 {offsets = [0, 96], sizes = [16, 16], strides = [1, 1]} : vector<16x128xf32> to vector<16x16xf32>
    "tpu.trace_start"() <{level = 10 : i32, message = "qd,kd->qk"}> : () -> ()
    %cst_60 = arith.constant dense<0.000000e+00> : vector<16x16xf32>
    %137 = tpu.matmul %134, %135, %cst_60 {dimension_numbers = #tpu.dot_dimension_numbers<[1], [1], [0], [0], [0, 0, 1, 0], [], []>} : vector<16x16xf32>, vector<16x16xf32>, vector<16x16xf32> -> vector<16x16xf32>
    "tpu.trace_stop"() : () -> ()
    %cst_61 = arith.constant 2.500000e-01 : f32
    %138 = vector.broadcast %cst_61 : f32 to vector<16x16xf32>
    %139 = arith.mulf %137, %138 : vector<16x16xf32>
    %c0_i32_62 = arith.constant 0 : i32
    %140 = vector.broadcast %c0_i32_62 : i32 to vector<16x16xi32>
    %141 = arith.cmpi eq, %7, %140 : vector<16x16xi32>
    %cst_63 = arith.constant -1.000000e+09 : f32
    %142 = vector.broadcast %cst_63 : f32 to vector<16x16xf32>
    %143 = arith.select %141, %142, %139 : vector<16x16xi1>, vector<16x16xf32>
    %cst_64 = arith.constant dense<0xFF800000> : vector<16xf32>
    %144 = vector.multi_reduction <maximumf>, %143, %cst_64 [1] : vector<16x16xf32> to vector<16xf32>
    %145 = vector.shape_cast %144 : vector<16xf32> to vector<16x1xf32>
    %146 = vector.broadcast %145 : vector<16x1xf32> to vector<16x16xf32>
    %147 = arith.subf %143, %146 : vector<16x16xf32>
    %148 = math.exp %147 : vector<16x16xf32>
    %cst_65 = arith.constant dense<0.000000e+00> : vector<16xf32>
    %149 = vector.multi_reduction <add>, %148, %cst_65 [1] : vector<16x16xf32> to vector<16xf32>
    %150 = vector.shape_cast %149 : vector<16xf32> to vector<16x1xf32>
    %151 = vector.broadcast %150 : vector<16x1xf32> to vector<16x16xf32>
    %152 = arith.divf %148, %151 : vector<16x16xf32>
    %cst_66 = arith.constant dense<0.000000e+00> : vector<16x16xf32>
    %153 = tpu.matmul %152, %136, %cst_66 {dimension_numbers = #tpu.dot_dimension_numbers<[1], [0], [0], [1], [0, 0, 1, 1], [], []>} : vector<16x16xf32>, vector<16x16xf32>, vector<16x16xf32> -> vector<16x16xf32>
    %154 = vector.extract_strided_slice %9 {offsets = [0, 112], sizes = [16, 16], strides = [1, 1]} : vector<16x128xf32> to vector<16x16xf32>
    %155 = vector.extract_strided_slice %11 {offsets = [0, 112], sizes = [16, 16], strides = [1, 1]} : vector<16x128xf32> to vector<16x16xf32>
    %156 = vector.extract_strided_slice %13 {offsets = [0, 112], sizes = [16, 16], strides = [1, 1]} : vector<16x128xf32> to vector<16x16xf32>
    "tpu.trace_start"() <{level = 10 : i32, message = "qd,kd->qk"}> : () -> ()
    %cst_67 = arith.constant dense<0.000000e+00> : vector<16x16xf32>
    %157 = tpu.matmul %154, %155, %cst_67 {dimension_numbers = #tpu.dot_dimension_numbers<[1], [1], [0], [0], [0, 0, 1, 0], [], []>} : vector<16x16xf32>, vector<16x16xf32>, vector<16x16xf32> -> vector<16x16xf32>
    "tpu.trace_stop"() : () -> ()
    %cst_68 = arith.constant 2.500000e-01 : f32
    %158 = vector.broadcast %cst_68 : f32 to vector<16x16xf32>
    %159 = arith.mulf %157, %158 : vector<16x16xf32>
    %c0_i32_69 = arith.constant 0 : i32
    %160 = vector.broadcast %c0_i32_69 : i32 to vector<16x16xi32>
    %161 = arith.cmpi eq, %7, %160 : vector<16x16xi32>
    %cst_70 = arith.constant -1.000000e+09 : f32
    %162 = vector.broadcast %cst_70 : f32 to vector<16x16xf32>
    %163 = arith.select %161, %162, %159 : vector<16x16xi1>, vector<16x16xf32>
    %cst_71 = arith.constant dense<0xFF800000> : vector<16xf32>
    %164 = vector.multi_reduction <maximumf>, %163, %cst_71 [1] : vector<16x16xf32> to vector<16xf32>
    %165 = vector.shape_cast %164 : vector<16xf32> to vector<16x1xf32>
    %166 = vector.broadcast %165 : vector<16x1xf32> to vector<16x16xf32>
    %167 = arith.subf %163, %166 : vector<16x16xf32>
    %168 = math.exp %167 : vector<16x16xf32>
    %cst_72 = arith.constant dense<0.000000e+00> : vector<16xf32>
    %169 = vector.multi_reduction <add>, %168, %cst_72 [1] : vector<16x16xf32> to vector<16xf32>
    %170 = vector.shape_cast %169 : vector<16xf32> to vector<16x1xf32>
    %171 = vector.broadcast %170 : vector<16x1xf32> to vector<16x16xf32>
    %172 = arith.divf %168, %171 : vector<16x16xf32>
    %cst_73 = arith.constant dense<0.000000e+00> : vector<16x16xf32>
    %173 = tpu.matmul %172, %156, %cst_73 {dimension_numbers = #tpu.dot_dimension_numbers<[1], [0], [0], [1], [0, 0, 1, 1], [], []>} : vector<16x16xf32>, vector<16x16xf32>, vector<16x16xf32> -> vector<16x16xf32>
    %174 = tpu.concatenate %33, %53, %73, %93, %113, %133, %153, %173 in 1 : vector<16x16xf32>, vector<16x16xf32>, vector<16x16xf32>, vector<16x16xf32>, vector<16x16xf32>, vector<16x16xf32>, vector<16x16xf32>, vector<16x16xf32> -> vector<16x128xf32>
    %c0_74 = arith.constant 0 : index
    %c0_75 = arith.constant 0 : index
    %175 = vector.load %arg8[%c0_74, %c0_75] : memref<128x128xf32, #tpu.memory_space<vmem>>, vector<128x128xf32>
    %cst_76 = arith.constant dense<0.000000e+00> : vector<16x128xf32>
    %176 = tpu.matmul %174, %175, %cst_76 {dimension_numbers = #tpu.dot_dimension_numbers<[1], [0], [0], [1], [0, 0, 1, 1], [], []>} : vector<16x128xf32>, vector<128x128xf32>, vector<16x128xf32> -> vector<16x128xf32>
    %c0_77 = arith.constant 0 : index
    %c0_78 = arith.constant 0 : index
    %c0_79 = arith.constant 0 : index
    %177 = vector.load %arg9[%c0_77, %c0_78, %c0_79] : memref<1x16x128xf32, #tpu.memory_space<vmem>>, vector<1x16x128xf32>
    %178 = vector.shape_cast %177 : vector<1x16x128xf32> to vector<16x128xf32>
    %179 = vector.shape_cast %176 : vector<16x128xf32> to vector<1x16x128xf32>
    tpu.vector_store %arg9[%c0_77, %c0_78, %c0_79], %179 {strides = array<i32>} : memref<1x16x128xf32, #tpu.memory_space<vmem>>, vector<1x16x128xf32>,
    return
  }
  func.func @transform_0(%arg0: i32) -> (i32, i32, i32) {
    %c0_i32 = arith.constant 0 : i32
    %c0_i32_0 = arith.constant 0 : i32
    %c0_i32_1 = arith.constant 0 : i32
    return %arg0, %c0_i32, %c0_i32_0 : i32, i32, i32
  }
  func.func @transform_1(%arg0: i32) -> (i32, i32, i32) {
    %c0_i32 = arith.constant 0 : i32
    %c0_i32_0 = arith.constant 0 : i32
    %c0_i32_1 = arith.constant 0 : i32
    return %arg0, %c0_i32, %c0_i32_0 : i32, i32, i32
  }
  func.func @transform_2(%arg0: i32) -> (i32, i32, i32) {
    %c0_i32 = arith.constant 0 : i32
    %c0_i32_0 = arith.constant 0 : i32
    %c0_i32_1 = arith.constant 0 : i32
    return %arg0, %c0_i32, %c0_i32_0 : i32, i32, i32
  }
  func.func @transform_3(%arg0: i32) -> (i32, i32, i32) {
    %c0_i32 = arith.constant 0 : i32
    %c0_i32_0 = arith.constant 0 : i32
    %c0_i32_1 = arith.constant 0 : i32
    return %arg0, %c0_i32, %c0_i32_0 : i32, i32, i32
  }
  func.func @transform_4(%arg0: i32) -> (i32, i32) {
    %c0_i32 = arith.constant 0 : i32
    %c0_i32_0 = arith.constant 0 : i32
    %c0_i32_1 = arith.constant 0 : i32
    return %c0_i32, %c0_i32_0 : i32, i32
  }
  func.func @transform_5(%arg0: i32) -> (i32, i32) {
    %c0_i32 = arith.constant 0 : i32
    %c0_i32_0 = arith.constant 0 : i32
    %c0_i32_1 = arith.constant 0 : i32
    return %c0_i32, %c0_i32_0 : i32, i32
  }
  func.func @transform_6(%arg0: i32) -> (i32, i32) {
    %c0_i32 = arith.constant 0 : i32
    %c0_i32_0 = arith.constant 0 : i32
    %c0_i32_1 = arith.constant 0 : i32
    return %c0_i32, %c0_i32_0 : i32, i32
  }
  func.func @transform_7(%arg0: i32) -> (i32, i32) {
    %c0_i32 = arith.constant 0 : i32
    %c0_i32_0 = arith.constant 0 : i32
    %c0_i32_1 = arith.constant 0 : i32
    return %c0_i32, %c0_i32_0 : i32, i32
  }
  func.func @transform_8(%arg0: i32) -> (i32, i32, i32) {
    %c0_i32 = arith.constant 0 : i32
    %c0_i32_0 = arith.constant 0 : i32
    %c0_i32_1 = arith.constant 0 : i32
    return %arg0, %c0_i32, %c0_i32_0 : i32, i32, i32
  }
}

</mosaic_0001>

<llo_original>
// kernel: multi_head_attention_block.1
$region0: #{multi_head_attention_block.1}
  #allocation0 [shape = 'u32[]', space=smem, size = 0x4, offset = 0x4, fixed_abs, tag = 'smem constant byte address 0x4 - core index']
  #allocation1 [shape = 'u32[144,128]{1,0:T(1,128)}', space=vmem, size = 0x12000, scoped, tag = 'internal scratch']
  %s0 = inlined_call_operand.vmem [shape: f32[2,16,128], index: 0, kind: input, shape index: {}]
  %s1 = inlined_call_operand.hbm [shape: f32[2,16,128], index: 1, kind: input, shape index: {}]
  %s2 = inlined_call_operand.hbm [shape: f32[2,16,128], index: 2, kind: input, shape index: {}]
  %s3 = inlined_call_operand.vmem [shape: s32[2,16,16], index: 3, kind: input, shape index: {}]
  %s4 = inlined_call_operand.hbm [shape: f32[128,128], index: 4, kind: input, shape index: {}]
  %s5 = inlined_call_operand.hbm [shape: f32[128,128], index: 5, kind: input, shape index: {}]
  %s6 = inlined_call_operand.hbm [shape: f32[128,128], index: 6, kind: input, shape index: {}]
  %s7 = inlined_call_operand.hbm [shape: f32[128,128], index: 7, kind: input, shape index: {}]
  %s8 = inlined_call_operand.hbm [shape: f32[2,16,128], index: 8, kind: output, shape index: {}]
  %s9 = sld [smem:[#allocation0]]
  $region89: #{multi_head_attention_block.1} parent=0
    _
  %s11 = ssub.s32 1, %s9
  %s12 = scalar_select 0, %s11, %s9
  $region1: #{multi_head_attention_block.1} parent=0
    #allocation2 [shape = 'u8[16384]{0}', space=vmem, size = 0x4000, scoped, tag = 'input window, operand 1']
    #allocation3 [shape = 's32[2]{0}', space=sflag, size = 0x8, scoped, tag = 'scoped memory for multi_head_attention_block.1']
    #allocation4 [shape = 's32[2]{0}', space=sflag, size = 0x8, scoped, tag = 'scoped memory for multi_head_attention_block.1']
    #allocation5 [shape = 'u8[16384]{0}', space=vmem, size = 0x4000, scoped, tag = 'input window, operand 2']
    #allocation6 [shape = 's32[2]{0}', space=sflag, size = 0x8, scoped, tag = 'scoped memory for multi_head_attention_block.1']
    #allocation7 [shape = 'u8[65536]{0}', space=vmem, size = 0x10000, scoped, tag = 'input window, operand 4, single buffered']
    #allocation8 [shape = 'u8[65536]{0}', space=vmem, size = 0x10000, scoped, tag = 'input window, operand 5, single buffered']
    #allocation9 [shape = 's32[1]{0}', space=sflag, size = 0x4, scoped, tag = 'scoped memory for multi_head_attention_block.1']
    #allocation10 [shape = 'u8[65536]{0}', space=vmem, size = 0x10000, scoped, tag = 'input window, operand 6, single buffered']
    #allocation11 [shape = 'u8[65536]{0}', space=vmem, size = 0x10000, scoped, tag = 'input window, operand 7, single buffered']
    #allocation12 [shape = 's32[1]{0}', space=sflag, size = 0x4, scoped, tag = 'scoped memory for multi_head_attention_block.1']
    #allocation13 [shape = 'u8[16384]{0}', space=vmem, size = 0x4000, scoped, tag = 'output window, operand 0']
    %13 = vsyncpa [#allocation3], 0
    %s14 = scalar_lea.sflag [#allocation3], 1
    %15 = vsyncpa %s14, 0
    %16 = vsyncpa [#allocation6], 0
    %s17 = scalar_lea.sflag [#allocation6], 1
    %18 = vsyncpa %s17, 0
    %19 = vsyncpa [#allocation9], 0
    %20 = vsyncpa [#allocation12], 0
    %21 = vsyncpa [#allocation4], 0
    %s22 = scalar_lea.sflag [#allocation4], 1
    %23 = vsyncpa %s22, 0
    loop: start=0, step=1, limit=4
    $region2: #{multi_head_attention_block.1} parent=1 // loop_pre_header
      _
    $region3: #{multi_head_attention_block.1} parent=1 // loop_header
      %s25 = sphi 0, %s29
      %p26 = scmp.ge.s32.totalorder %s25, 4
      %s35 = sphi 0, %s37
      %s38 = sphi 0, %s35
      %s39 = sphi 0, %s38
      %s55 = sphi 0, %s39
      %s61 = sphi 0, %s63
      %s64 = sphi 0, %s61
      %s65 = sphi 0, %s64
      %s81 = sphi 0, %s65
      %s87 = sphi 0, %s89
      %s90 = sphi 0, %s87
      %s91 = sphi 0, %s90
      %s107 = sphi 0, %s91
      %s113 = sphi 0, %s115
      %s116 = sphi 0, %s113
      %s117 = sphi 0, %s116
      %s133 = sphi 0, %s117
      %s137 = sphi 0, %s137
      %s139 = sphi 0, %s137
      %s140 = sphi 0, %s139
      %s154 = sphi 0, %s140
      %s158 = sphi 0, %s158
      %s160 = sphi 0, %s158
      %s161 = sphi 0, %s160
      %s175 = sphi 0, %s161
      %s179 = sphi 0, %s179
      %s181 = sphi 0, %s179
      %s182 = sphi 0, %s181
      %s196 = sphi 0, %s182
      %s200 = sphi 0, %s200
      %s202 = sphi 0, %s200
      %s203 = sphi 0, %s202
      %s217 = sphi 0, %s203
      %s223 = sphi 0, %s225
      %s226 = sphi 0, %s223
      %s227 = sphi 0, %s226
      %s243 = sphi 0, %s227
    $region4: #{multi_head_attention_block.1} parent=1 // loop_header_branch
      %28 = sbr.rel (%p26) target = $region8
    $region5: #{multi_head_attention_block.1} parent=1 // loop_body
      %s30 = ssub.s32 %s25, 1
      %s31 = ssub.s32 %s25, 2
      %s32 = sadd.s32 %s25, 1
      %s33 = ssub.s32 %s25, %s32
      %p34 = scmp.eq.s32.totalorder %s33, 0
      %s36 = sadd.s32 %s35, 1
      %s37 = scalar_select %p34, %s35, %s36
      %p40 = pneg %p34
      %p41 = scmp.eq.s32.totalorder %s25, 1
      %p42 = por %p40, %p41
      %p43 = scmp.ne.s32.totalorder %s35, %s38
      %p44 = scmp.eq.s32.totalorder %s25, 0
      %p45 = por %p43, %p44
      %p46 = scmp.ne.s32.totalorder %s35, %s38
      %p47 = scmp.eq.s32.totalorder %s30, 1
      %p48 = por %p46, %p47
      %p49 = scmp.ne.s32.totalorder %s38, %s39
      %p50 = scmp.eq.s32.totalorder %s30, 0
      %p51 = por %p49, %p50
      %p52 = scmp.ne.s32.totalorder %s38, %s39
      %p53 = scmp.eq.s32.totalorder %s31, 1
      %p54 = por %p52, %p53
      %p56 = scmp.ne.s32.totalorder %s39, %s55
      %p57 = scmp.eq.s32.totalorder %s31, 0
      %p58 = por %p56, %p57
      %s59 = ssub.s32 %s25, %s32
      %p60 = scmp.eq.s32.totalorder %s59, 0
      %s62 = sadd.s32 %s61, 1
      %s63 = scalar_select %p60, %s61, %s62
      %p66 = pneg %p60
      %p67 = scmp.eq.s32.totalorder %s25, 1
      %p68 = por %p66, %p67
      %p69 = scmp.ne.s32.totalorder %s61, %s64
      %p70 = scmp.eq.s32.totalorder %s25, 0
      %p71 = por %p69, %p70
      %p72 = scmp.ne.s32.totalorder %s61, %s64
      %p73 = scmp.eq.s32.totalorder %s30, 1
      %p74 = por %p72, %p73
      %p75 = scmp.ne.s32.totalorder %s64, %s65
      %p76 = scmp.eq.s32.totalorder %s30, 0
      %p77 = por %p75, %p76
      %p78 = scmp.ne.s32.totalorder %s64, %s65
      %p79 = scmp.eq.s32.totalorder %s31, 1
      %p80 = por %p78, %p79
      %p82 = scmp.ne.s32.totalorder %s65, %s81
      %p83 = scmp.eq.s32.totalorder %s31, 0
      %p84 = por %p82, %p83
      %s85 = ssub.s32 %s25, %s32
      %p86 = scmp.eq.s32.totalorder %s85, 0
      %s88 = sadd.s32 %s87, 1
      %s89 = scalar_select %p86, %s87, %s88
      %p92 = pneg %p86
      %p93 = scmp.eq.s32.totalorder %s25, 1
      %p94 = por %p92, %p93
      %p95 = scmp.ne.s32.totalorder %s87, %s90
      %p96 = scmp.eq.s32.totalorder %s25, 0
      %p97 = por %p95, %p96
      %p98 = scmp.ne.s32.totalorder %s87, %s90
      %p99 = scmp.eq.s32.totalorder %s30, 1
      %p100 = por %p98, %p99
      %p101 = scmp.ne.s32.totalorder %s90, %s91
      %p102 = scmp.eq.s32.totalorder %s30, 0
      %p103 = por %p101, %p102
      %p104 = scmp.ne.s32.totalorder %s90, %s91
      %p105 = scmp.eq.s32.totalorder %s31, 1
      %p106 = por %p104, %p105
      %p108 = scmp.ne.s32.totalorder %s91, %s107
      %p109 = scmp.eq.s32.totalorder %s31, 0
      %p110 = por %p108, %p109
      %s111 = ssub.s32 %s25, %s32
      %p112 = scmp.eq.s32.totalorder %s111, 0
      %s114 = sadd.s32 %s113, 1
      %s115 = scalar_select %p112, %s113, %s114
      %p118 = pneg %p112
      %p119 = scmp.eq.s32.totalorder %s25, 1
      %p120 = por %p118, %p119
      %p121 = scmp.ne.s32.totalorder %s113, %s116
      %p122 = scmp.eq.s32.totalorder %s25, 0
      %p123 = por %p121, %p122
      %p124 = scmp.ne.s32.totalorder %s113, %s116
      %p125 = scmp.eq.s32.totalorder %s30, 1
      %p126 = por %p124, %p125
      %p127 = scmp.ne.s32.totalorder %s116, %s117
      %p128 = scmp.eq.s32.totalorder %s30, 0
      %p129 = por %p127, %p128
      %p130 = scmp.ne.s32.totalorder %s116, %s117
      %p131 = scmp.eq.s32.totalorder %s31, 1
      %p132 = por %p130, %p131
      %p134 = scmp.ne.s32.totalorder %s117, %s133
      %p135 = scmp.eq.s32.totalorder %s31, 0
      %p136 = por %p134, %p135
      %s138 = sadd.s32 %s137, 1
      %p141 = scmp.eq.s32.totalorder %s25, 1
      %p142 = scmp.ne.s32.totalorder %s137, %s139
      %p143 = scmp.eq.s32.totalorder %s25, 0
      %p144 = por %p142, %p143
      %p145 = scmp.ne.s32.totalorder %s137, %s139
      %p146 = scmp.eq.s32.totalorder %s30, 1
      %p147 = por %p145, %p146
      %p148 = scmp.ne.s32.totalorder %s139, %s140
      %p149 = scmp.eq.s32.totalorder %s30, 0
      %p150 = por %p148, %p149
      %p151 = scmp.ne.s32.totalorder %s139, %s140
      %p152 = scmp.eq.s32.totalorder %s31, 1
      %p153 = por %p151, %p152
      %p155 = scmp.ne.s32.totalorder %s140, %s154
      %p156 = scmp.eq.s32.totalorder %s31, 0
      %p157 = por %p155, %p156
      %s159 = sadd.s32 %s158, 1
      %p162 = scmp.eq.s32.totalorder %s25, 1
      %p163 = scmp.ne.s32.totalorder %s158, %s160
      %p164 = scmp.eq.s32.totalorder %s25, 0
      %p165 = por %p163, %p164
      %p166 = scmp.ne.s32.totalorder %s158, %s160
      %p167 = scmp.eq.s32.totalorder %s30, 1
      %p168 = por %p166, %p167
      %p169 = scmp.ne.s32.totalorder %s160, %s161
      %p170 = scmp.eq.s32.totalorder %s30, 0
      %p171 = por %p169, %p170
      %p172 = scmp.ne.s32.totalorder %s160, %s161
      %p173 = scmp.eq.s32.totalorder %s31, 1
      %p174 = por %p172, %p173
      %p176 = scmp.ne.s32.totalorder %s161, %s175
      %p177 = scmp.eq.s32.totalorder %s31, 0
      %p178 = por %p176, %p177
      %s180 = sadd.s32 %s179, 1
      %p183 = scmp.eq.s32.totalorder %s25, 1
      %p184 = scmp.ne.s32.totalorder %s179, %s181
      %p185 = scmp.eq.s32.totalorder %s25, 0
      %p186 = por %p184, %p185
      %p187 = scmp.ne.s32.totalorder %s179, %s181
      %p188 = scmp.eq.s32.totalorder %s30, 1
      %p189 = por %p187, %p188
      %p190 = scmp.ne.s32.totalorder %s181, %s182
      %p191 = scmp.eq.s32.totalorder %s30, 0
      %p192 = por %p190, %p191
      %p193 = scmp.ne.s32.totalorder %s181, %s182
      %p194 = scmp.eq.s32.totalorder %s31, 1
      %p195 = por %p193, %p194
      %p197 = scmp.ne.s32.totalorder %s182, %s196
      %p198 = scmp.eq.s32.totalorder %s31, 0
      %p199 = por %p197, %p198
      %s201 = sadd.s32 %s200, 1
      %p204 = scmp.eq.s32.totalorder %s25, 1
      %p205 = scmp.ne.s32.totalorder %s200, %s202
      %p206 = scmp.eq.s32.totalorder %s25, 0
      %p207 = por %p205, %p206
      %p208 = scmp.ne.s32.totalorder %s200, %s202
      %p209 = scmp.eq.s32.totalorder %s30, 1
      %p210 = por %p208, %p209
      %p211 = scmp.ne.s32.totalorder %s202, %s203
      %p212 = scmp.eq.s32.totalorder %s30, 0
      %p213 = por %p211, %p212
      %p214 = scmp.ne.s32.totalorder %s202, %s203
      %p215 = scmp.eq.s32.totalorder %s31, 1
      %p216 = por %p214, %p215
      %p218 = scmp.ne.s32.totalorder %s203, %s217
      %p219 = scmp.eq.s32.totalorder %s31, 0
      %p220 = por %p218, %p219
      %s221 = ssub.s32 %s25, %s32
      %p222 = scmp.eq.s32.totalorder %s221, 0
      %s224 = sadd.s32 %s223, 1
      %s225 = scalar_select %p222, %s223, %s224
      %p228 = pneg %p222
      %p229 = scmp.eq.s32.totalorder %s25, 1
      %p230 = por %p228, %p229
      %p231 = scmp.ne.s32.totalorder %s223, %s226
      %p232 = scmp.eq.s32.totalorder %s25, 0
      %p233 = por %p231, %p232
      %p234 = scmp.ne.s32.totalorder %s223, %s226
      %p235 = scmp.eq.s32.totalorder %s30, 1
      %p236 = por %p234, %p235
      %p237 = scmp.ne.s32.totalorder %s226, %s227
      %p238 = scmp.eq.s32.totalorder %s30, 0
      %p239 = por %p237, %p238
      %p240 = scmp.ne.s32.totalorder %s226, %s227
      %p241 = scmp.eq.s32.totalorder %s31, 1
      %p242 = por %p240, %p241
      %p244 = scmp.ne.s32.totalorder %s227, %s243
      %p245 = scmp.eq.s32.totalorder %s31, 0
      %p246 = por %p244, %p245
      %p247 = scmp.le.s32.totalorder 1, %s25
      %p248 = scmp.lt.s32.totalorder %s25, 3
      %p249 = pnand %p247, %p248
      %p250 = pneg %p249
      // Predicated region
      $region9: #{multi_head_attention_block.1} parent=5 // pred_check
        _
      $region10: #{multi_head_attention_block.1} parent=5 // pred_check_branch
        %252 = sbr.rel (%p249) target = $region12
      $region11: #{multi_head_attention_block.1} parent=5 // pred_region
        %s253 = ssub.s32 %s25, 1
        // Predicated region
        $region13: #{multi_head_attention_block.1} parent=11 // pred_check
          %p254 = pneg %p150
        $region14: #{multi_head_attention_block.1} parent=11 // pred_check_branch
          %256 = sbr.rel (%p254) target = $region16
        $region15: #{multi_head_attention_block.1} parent=11 // pred_region
          %s258 = ssub.s32 2048, 2048
          %259 = vsyncadd [#allocation6], %s258
          %s260 = sshll.u32 [#allocation7], 4
          %s261 = int_to_ptr.vmem [resolvable:$true] %s260
          %266 = dma.hbm_to_vmem [thread:$0]  %s4, 2048, %s261, [#allocation6], 128, 128, 8
        $region16: #{multi_head_attention_block.1} parent=11 // pred_fallthru
          _
        // Predicated region
        $region17: #{multi_head_attention_block.1} parent=11 // pred_check
          %p267 = pneg %p171
        $region18: #{multi_head_attention_block.1} parent=11 // pred_check_branch
          %269 = sbr.rel (%p267) target = $region20
        $region19: #{multi_head_attention_block.1} parent=11 // pred_region
          %s271 = ssub.s32 2048, 2048
          %272 = vsyncadd [#allocation9], %s271
          %s273 = sshll.u32 [#allocation8], 4
          %s274 = int_to_ptr.vmem [resolvable:$true] %s273
          %279 = dma.hbm_to_vmem [thread:$0]  %s5, 2048, %s274, [#allocation9], 128, 128, 8
        $region20: #{multi_head_attention_block.1} parent=11 // pred_fallthru
          _
        // Predicated region
        $region21: #{multi_head_attention_block.1} parent=11 // pred_check
          %p280 = pneg %p192
        $region22: #{multi_head_attention_block.1} parent=11 // pred_check_branch
          %282 = sbr.rel (%p280) target = $region24
        $region23: #{multi_head_attention_block.1} parent=11 // pred_region
          %s284 = ssub.s32 2048, 2048
          %285 = vsyncadd [#allocation9], %s284
          %s286 = sshll.u32 [#allocation10], 4
          %s287 = int_to_ptr.vmem [resolvable:$true] %s286
          %292 = dma.hbm_to_vmem [thread:$0]  %s6, 2048, %s287, [#allocation9], 128, 128, 8
        $region24: #{multi_head_attention_block.1} parent=11 // pred_fallthru
          _
        // Predicated region
        $region25: #{multi_head_attention_block.1} parent=11 // pred_check
          %p293 = pneg %p213
        $region26: #{multi_head_attention_block.1} parent=11 // pred_check_branch
          %295 = sbr.rel (%p293) target = $region28
        $region27: #{multi_head_attention_block.1} parent=11 // pred_region
          %s297 = ssub.s32 2048, 2048
          %298 = vsyncadd [#allocation12], %s297
          %s299 = sshll.u32 [#allocation11], 4
          %s300 = int_to_ptr.vmem [resolvable:$true] %s299
          %305 = dma.hbm_to_vmem [thread:$0]  %s7, 2048, %s300, [#allocation12], 128, 128, 8
        $region28: #{multi_head_attention_block.1} parent=11 // pred_fallthru
          _
      $region12: #{multi_head_attention_block.1} parent=5 // pred_fallthru
        _
      %p306 = scmp.lt.s32.totalorder %s25, 2
      // Predicated region
      $region29: #{multi_head_attention_block.1} parent=5 // pred_check
        %p307 = pneg %p306
      $region30: #{multi_head_attention_block.1} parent=5 // pred_check_branch
        %309 = sbr.rel (%p307) target = $region32
      $region31: #{multi_head_attention_block.1} parent=5 // pred_region
        // Predicated region
        $region33: #{multi_head_attention_block.1} parent=31 // pred_check
          %p310 = pneg %p45
        $region34: #{multi_head_attention_block.1} parent=31 // pred_check_branch
          %312 = sbr.rel (%p310) target = $region36
        $region35: #{multi_head_attention_block.1} parent=31 // pred_region
          %p313 = scmp.lt.s32.totalorder %s25, 1
          %s314 = scalar_select %p313, %s25, 1
          %s315 = smul.addr %s314, 2
          %s316 = smul.addr %s315, 8
          %s317 = scalar_lea.vmem %s0, %s316
        $region36: #{multi_head_attention_block.1} parent=31 // pred_fallthru
          _
        // Predicated region
        $region37: #{multi_head_attention_block.1} parent=31 // pred_check
          %p318 = pneg %p71
        $region38: #{multi_head_attention_block.1} parent=31 // pred_check_branch
          %320 = sbr.rel (%p318) target = $region40
        $region39: #{multi_head_attention_block.1} parent=31 // pred_region
          %s321 = sand.u32 %s61, 1
          %s322 = scalar_lea.sflag [#allocation3], %s321
          %s323 = sand.u32 %s61, 1
          %s324 = smul.addr %s323, 16
          %s325 = scalar_lea.vmem [#allocation2], %s324
          %s327 = ssub.s32 256, 256
          %328 = vsyncadd %s322, %s327
          %s329 = smul.addr %s25, 2
          %s330 = smul.addr %s329, 128
          %s331 = scalar_lea.hbm %s1, %s330
          %s332 = sshll.u32 %s325, 4
          %s333 = int_to_ptr.vmem [resolvable:$true] %s332
          %338 = dma.hbm_to_vmem [thread:$0]  %s331, 256, %s333, %s322, 128, 128, 8
        $region40: #{multi_head_attention_block.1} parent=31 // pred_fallthru
          _
        // Predicated region
        $region41: #{multi_head_attention_block.1} parent=31 // pred_check
          %p339 = pneg %p97
        $region42: #{multi_head_attention_block.1} parent=31 // pred_check_branch
          %341 = sbr.rel (%p339) target = $region44
        $region43: #{multi_head_attention_block.1} parent=31 // pred_region
          %s342 = sand.u32 %s25, 1
          %s343 = scalar_lea.sflag [#allocation6], %s342
          %s344 = sand.u32 %s87, 1
          %s345 = smul.addr %s344, 16
          %s346 = scalar_lea.vmem [#allocation5], %s345
          %s348 = ssub.s32 256, 256
          %349 = vsyncadd %s343, %s348
          %s350 = smul.addr %s25, 2
          %s351 = smul.addr %s350, 128
          %s352 = scalar_lea.hbm %s2, %s351
          %s353 = sshll.u32 %s346, 4
          %s354 = int_to_ptr.vmem [resolvable:$true] %s353
          %359 = dma.hbm_to_vmem [thread:$0]  %s352, 256, %s354, %s343, 128, 128, 8
        $region44: #{multi_head_attention_block.1} parent=31 // pred_fallthru
          _
        // Predicated region
        $region45: #{multi_head_attention_block.1} parent=31 // pred_check
          %p360 = pneg %p123
        $region46: #{multi_head_attention_block.1} parent=31 // pred_check_branch
          %362 = sbr.rel (%p360) target = $region48
        $region47: #{multi_head_attention_block.1} parent=31 // pred_region
          %p363 = scmp.lt.s32.totalorder %s25, 1
          %s364 = scalar_select %p363, %s25, 1
          %s365 = smul.addr %s364, 2
          %s366 = smul.addr %s365, 8
          %s367 = scalar_lea.vmem %s3, %s366
        $region48: #{multi_head_attention_block.1} parent=31 // pred_fallthru
          _
      $region32: #{multi_head_attention_block.1} parent=5 // pred_fallthru
        _
      %p368 = scmp.le.s32.totalorder 1, %s25
      %p369 = scmp.lt.s32.totalorder %s25, 3
      %p370 = pnand %p368, %p369
      %p371 = pneg %p370
      // Predicated region
      $region49: #{multi_head_attention_block.1} parent=5 // pred_check
        _
      $region50: #{multi_head_attention_block.1} parent=5 // pred_check_branch
        %373 = sbr.rel (%p370) target = $region52
      $region51: #{multi_head_attention_block.1} parent=5 // pred_region
        %s374 = ssub.s32 %s25, 1
        %s375 = sand.u32 %s64, 1
        %s376 = scalar_lea.sflag [#allocation3], %s375
        %s377 = sand.u32 %s64, 1
        %s378 = smul.addr %s377, 16
        %s379 = scalar_lea.vmem [#allocation2], %s378
        // Predicated region
        $region53: #{multi_head_attention_block.1} parent=51 // pred_check
          %p380 = pneg %p77
        $region54: #{multi_head_attention_block.1} parent=51 // pred_check_branch
          %382 = sbr.rel (%p380) target = $region56
        $region55: #{multi_head_attention_block.1} parent=51 // pred_region
          %383 = dma.done %s376, 256
        $region56: #{multi_head_attention_block.1} parent=51 // pred_fallthru
          _
        %s384 = sand.u32 %s30, 1
        %s385 = scalar_lea.sflag [#allocation6], %s384
        %s386 = sand.u32 %s90, 1
        %s387 = smul.addr %s386, 16
        %s388 = scalar_lea.vmem [#allocation5], %s387
        // Predicated region
        $region57: #{multi_head_attention_block.1} parent=51 // pred_check
          %p389 = pneg %p103
        $region58: #{multi_head_attention_block.1} parent=51 // pred_check_branch
          %391 = sbr.rel (%p389) target = $region60
        $region59: #{multi_head_attention_block.1} parent=51 // pred_region
          %392 = dma.done %s385, 256
        $region60: #{multi_head_attention_block.1} parent=51 // pred_fallthru
          _
        // Predicated region
        $region61: #{multi_head_attention_block.1} parent=51 // pred_check
          %p393 = pneg %p150
        $region62: #{multi_head_attention_block.1} parent=51 // pred_check_branch
          %395 = sbr.rel (%p393) target = $region64
        $region63: #{multi_head_attention_block.1} parent=51 // pred_region
          %396 = dma.done [#allocation6], 2048
        $region64: #{multi_head_attention_block.1} parent=51 // pred_fallthru
          _
        // Predicated region
        $region65: #{multi_head_attention_block.1} parent=51 // pred_check
          %p397 = pneg %p171
        $region66: #{multi_head_attention_block.1} parent=51 // pred_check_branch
          %399 = sbr.rel (%p397) target = $region68
        $region67: #{multi_head_attention_block.1} parent=51 // pred_region
          %400 = dma.done [#allocation9], 2048
        $region68: #{multi_head_attention_block.1} parent=51 // pred_fallthru
          _
        // Predicated region
        $region69: #{multi_head_attention_block.1} parent=51 // pred_check
          %p401 = pneg %p192
        $region70: #{multi_head_attention_block.1} parent=51 // pred_check_branch
          %403 = sbr.rel (%p401) target = $region72
        $region71: #{multi_head_attention_block.1} parent=51 // pred_region
          %404 = dma.done [#allocation9], 2048
        $region72: #{multi_head_attention_block.1} parent=51 // pred_fallthru
          _
        // Predicated region
        $region73: #{multi_head_attention_block.1} parent=51 // pred_check
          %p405 = pneg %p213
        $region74: #{multi_head_attention_block.1} parent=51 // pred_check_branch
          %407 = sbr.rel (%p405) target = $region76
        $region75: #{multi_head_attention_block.1} parent=51 // pred_region
          %408 = dma.done [#allocation12], 2048
        $region76: #{multi_head_attention_block.1} parent=51 // pred_fallthru
          _
        %p409 = scmp.lt.s32.totalorder %s30, 1
        %s410 = scalar_select %p409, %s30, 1
        %s411 = smul.addr %s410, 2
        %s412 = smul.addr %s411, 8
        %s413 = scalar_lea.vmem %s0, %s412
        %p414 = pneg %p51
        %p415 = pneg %p48
        %s416 = sand.u32 %s64, 1
        %s417 = scalar_lea.sflag [#allocation3], %s416
        %s418 = sand.u32 %s64, 1
        %s419 = smul.addr %s418, 16
        %s420 = scalar_lea.vmem [#allocation2], %s419
        %p421 = pneg %p77
        %p422 = pneg %p74
        %s423 = sand.u32 %s30, 1
        %s424 = scalar_lea.sflag [#allocation6], %s423
        %s425 = sand.u32 %s90, 1
        %s426 = smul.addr %s425, 16
        %s427 = scalar_lea.vmem [#allocation5], %s426
        %p428 = pneg %p103
        %p429 = pneg %p100
        %p430 = scmp.lt.s32.totalorder %s30, 1
        %s431 = scalar_select %p430, %s30, 1
        %s432 = smul.addr %s431, 2
        %s433 = smul.addr %s432, 8
        %s434 = scalar_lea.vmem %s3, %s433
        %p435 = pneg %p129
        %p436 = pneg %p126
        %p437 = pneg %p150
        %p438 = pneg %p147
        %p439 = pneg %p171
        %p440 = pneg %p168
        %p441 = pneg %p192
        %p442 = pneg %p189
        %p443 = pneg %p213
        %p444 = pneg %p210
        %p445 = pneg %p239
        %p446 = pneg %p236
        %s447 = sand.u32 %s226, 1
        %s448 = scalar_lea.sflag [#allocation4], %s447
        %s449 = sand.u32 %s226, 1
        %s450 = smul.addr %s449, 16
        %s451 = scalar_lea.vmem [#allocation13], %s450
        %p452 = scmp.lt.s32.totalorder %s30, 1
        %s453 = scalar_select %p452, %s30, 1
        %s454 = smul.addr %s453, 2
        %s455 = smul.addr %s454, 8
        %s456 = scalar_lea.vmem %s0, %s455
        %p457 = scmp.lt.s32.totalorder %s30, 1
        %s458 = scalar_select %p457, %s30, 1
        %s459 = smul.addr %s458, 2
        %s460 = smul.addr %s459, 8
        %s461 = scalar_lea.vmem %s3, %s460
        %v462 = vld [vmem:[%s456] sm:$0xff]
        %v463 = vld [vmem:[%s456 + $0x8] sm:$0xff]
        %v464 = vld [vmem:[%s379] sm:$0xff]
        %v465 = vld [vmem:[%s379 + $0x8] sm:$0xff]
        %v466 = vld [vmem:[%s388] sm:$0xff]
        %v467 = vld [vmem:[%s388 + $0x8] sm:$0xff]
        %v468 = vld [vmem:[%s461] sm:$0xff]
        %v469 = vld [vmem:[%s461 + $0x8] sm:$0xff]
        %v470 = vld [vmem:[#allocation7] sm:$0xff]
        %v471 = vld [vmem:[#allocation7 + $0x8] sm:$0xff]
        %v472 = vld [vmem:[#allocation7 + $0x10] sm:$0xff]
        %v473 = vld [vmem:[#allocation7 + $0x18] sm:$0xff]
        %v474 = vld [vmem:[#allocation7 + $0x20] sm:$0xff]
        %v475 = vld [vmem:[#allocation7 + $0x28] sm:$0xff]
        %v476 = vld [vmem:[#allocation7 + $0x30] sm:$0xff]
        %v477 = vld [vmem:[#allocation7 + $0x38] sm:$0xff]
        %v478 = vld [vmem:[#allocation7 + $0x40] sm:$0xff]
        %v479 = vld [vmem:[#allocation7 + $0x48] sm:$0xff]
        %v480 = vld [vmem:[#allocation7 + $0x50] sm:$0xff]
        %v481 = vld [vmem:[#allocation7 + $0x58] sm:$0xff]
        %v482 = vld [vmem:[#allocation7 + $0x60] sm:$0xff]
        %v483 = vld [vmem:[#allocation7 + $0x68] sm:$0xff]
        %v484 = vld [vmem:[#allocation7 + $0x70] sm:$0xff]
        %v485 = vld [vmem:[#allocation7 + $0x78] sm:$0xff]
        %486 = vmatprep.subr.mxu0 0.0
        %487 = vmatpush1.msra.mxu0 %v485
        %488 = vmatprep.subr.mxu0 0.0
        %489 = vmatpush1.msra.mxu0 %v484
        %490 = vmatprep.subr.mxu0 0.0
        %491 = vmatpush1.msra.mxu0 %v483
        %492 = vmatprep.subr.mxu0 0.0
        %493 = vmatpush1.msra.mxu0 %v482
        %494 = vmatprep.subr.mxu0 0.0
        %495 = vmatpush1.msra.mxu0 %v481
        %496 = vmatprep.subr.mxu0 0.0
        %497 = vmatpush1.msra.mxu0 %v480
        %498 = vmatprep.subr.mxu0 0.0
        %499 = vmatpush1.msra.mxu0 %v479
        %500 = vmatprep.subr.mxu0 0.0
        %501 = vmatpush1.msra.mxu0 %v478
        %502 = vmatprep.subr.mxu0 0.0
        %503 = vmatpush1.msra.mxu0 %v477
        %504 = vmatprep.subr.mxu0 0.0
        %505 = vmatpush1.msra.mxu0 %v476
        %506 = vmatprep.subr.mxu0 0.0
        %507 = vmatpush1.msra.mxu0 %v475
        %508 = vmatprep.subr.mxu0 0.0
        %509 = vmatpush1.msra.mxu0 %v474
        %510 = vmatprep.subr.mxu0 0.0
        %511 = vmatpush1.msra.mxu0 %v473
        %512 = vmatprep.subr.mxu0 0.0
        %513 = vmatpush1.msra.mxu0 %v472
        %514 = vmatprep.subr.mxu0 0.0
        %515 = vmatpush1.msra.mxu0 %v471
        %516 = vmatprep.subr.mxu0 0.0
        %517 = vmatpush1.msra.mxu0 %v470
        %518 = vmatprep.subr.mxu0 0.0
        %519 = vmatpush2.msra.mxu0 0.0
        %520 = vmatprep.subr.mxu0 0.0
        %521 = vmatpush2.msra.mxu0 0.0
        %522 = vmatprep.subr.mxu0 0.0
        %523 = vmatpush2.msra.mxu0 0.0
        %524 = vmatprep.subr.mxu0 0.0
        %525 = vmatpush2.msra.mxu0 0.0
        %526 = vmatprep.subr.mxu0 0.0
        %527 = vmatpush2.msra.mxu0 0.0
        %528 = vmatprep.subr.mxu0 0.0
        %529 = vmatpush2.msra.mxu0 0.0
        %530 = vmatprep.subr.mxu0 0.0
        %531 = vmatpush2.msra.mxu0 0.0
        %532 = vmatprep.subr.mxu0 0.0
        %533 = vmatpush2.msra.mxu0 0.0
        %534 = vmatprep.subr.mxu0 0.0
        %535 = vmatpush2.msra.mxu0 0.0
        %536 = vmatprep.subr.mxu0 0.0
        %537 = vmatpush2.msra.mxu0 0.0
        %538 = vmatprep.subr.mxu0 0.0
        %539 = vmatpush2.msra.mxu0 0.0
        %540 = vmatprep.subr.mxu0 0.0
        %541 = vmatpush2.msra.mxu0 0.0
        %542 = vmatprep.subr.mxu0 0.0
        %543 = vmatpush2.msra.mxu0 0.0
        %544 = vmatprep.subr.mxu0 0.0
        %545 = vmatpush2.msra.mxu0 0.0
        %546 = vmatprep.subr.mxu0 0.0
        %547 = vmatpush2.msra.mxu0 0.0
        %548 = vmatprep.subr.mxu0 0.0
        %549 = vmatpush2.msra.mxu0 0.0
        %550 = vmatprep.mubr.f32.mxu0 0.0
        %551 = vmatmul.mubr.f32.gmra.mxu0 %v462
        %v552 = vpop.f32.mrf.mxu0
        %v553 = vadd.f32 0.0, %v552
        %v554 = vpop.f32.mrf.mxu0
        %555 = vmatprep.mubr.f32.mxu0 0.0
        %556 = vmatmul.mubr.f32.gmra.mxu0 %v463
        %v557 = vpop.f32.mrf.mxu0
        %v558 = vadd.f32 0.0, %v557
        %v559 = vpop.f32.mrf.mxu0
        %560 = vdwg.mxu0
        %v561 = vld [vmem:[#allocation8] sm:$0xff]
        %v562 = vld [vmem:[#allocation8 + $0x8] sm:$0xff]
        %v563 = vld [vmem:[#allocation8 + $0x10] sm:$0xff]
        %v564 = vld [vmem:[#allocation8 + $0x18] sm:$0xff]
        %v565 = vld [vmem:[#allocation8 + $0x20] sm:$0xff]
        %v566 = vld [vmem:[#allocation8 + $0x28] sm:$0xff]
        %v567 = vld [vmem:[#allocation8 + $0x30] sm:$0xff]
        %v568 = vld [vmem:[#allocation8 + $0x38] sm:$0xff]
        %v569 = vld [vmem:[#allocation8 + $0x40] sm:$0xff]
        %v570 = vld [vmem:[#allocation8 + $0x48] sm:$0xff]
        %v571 = vld [vmem:[#allocation8 + $0x50] sm:$0xff]
        %v572 = vld [vmem:[#allocation8 + $0x58] sm:$0xff]
        %v573 = vld [vmem:[#allocation8 + $0x60] sm:$0xff]
        %v574 = vld [vmem:[#allocation8 + $0x68] sm:$0xff]
        %v575 = vld [vmem:[#allocation8 + $0x70] sm:$0xff]
        %v576 = vld [vmem:[#allocation8 + $0x78] sm:$0xff]
        %577 = vmatprep.subr.mxu0 0.0
        %578 = vmatpush1.msra.mxu0 %v576
        %579 = vmatprep.subr.mxu0 0.0
        %580 = vmatpush1.msra.mxu0 %v575
        %581 = vmatprep.subr.mxu0 0.0
        %582 = vmatpush1.msra.mxu0 %v574
        %583 = vmatprep.subr.mxu0 0.0
        %584 = vmatpush1.msra.mxu0 %v573
        %585 = vmatprep.subr.mxu0 0.0
        %586 = vmatpush1.msra.mxu0 %v572
        %587 = vmatprep.subr.mxu0 0.0
        %588 = vmatpush1.msra.mxu0 %v571
        %589 = vmatprep.subr.mxu0 0.0
        %590 = vmatpush1.msra.mxu0 %v570
        %591 = vmatprep.subr.mxu0 0.0
        %592 = vmatpush1.msra.mxu0 %v569
        %593 = vmatprep.subr.mxu0 0.0
        %594 = vmatpush1.msra.mxu0 %v568
        %595 = vmatprep.subr.mxu0 0.0
        %596 = vmatpush1.msra.mxu0 %v567
        %597 = vmatprep.subr.mxu0 0.0
        %598 = vmatpush1.msra.mxu0 %v566
        %599 = vmatprep.subr.mxu0 0.0
        %600 = vmatpush1.msra.mxu0 %v565
        %601 = vmatprep.subr.mxu0 0.0
        %602 = vmatpush1.msra.mxu0 %v564
        %603 = vmatprep.subr.mxu0 0.0
        %604 = vmatpush1.msra.mxu0 %v563
        %605 = vmatprep.subr.mxu0 0.0
        %606 = vmatpush1.msra.mxu0 %v562
        %607 = vmatprep.subr.mxu0 0.0
        %608 = vmatpush1.msra.mxu0 %v561
        %609 = vmatprep.subr.mxu0 0.0
        %610 = vmatpush2.msra.mxu0 0.0
        %611 = vmatprep.subr.mxu0 0.0
        %612 = vmatpush2.msra.mxu0 0.0
        %613 = vmatprep.subr.mxu0 0.0
        %614 = vmatpush2.msra.mxu0 0.0
        %615 = vmatprep.subr.mxu0 0.0
        %616 = vmatpush2.msra.mxu0 0.0
        %617 = vmatprep.subr.mxu0 0.0
        %618 = vmatpush2.msra.mxu0 0.0
        %619 = vmatprep.subr.mxu0 0.0
        %620 = vmatpush2.msra.mxu0 0.0
        %621 = vmatprep.subr.mxu0 0.0
        %622 = vmatpush2.msra.mxu0 0.0
        %623 = vmatprep.subr.mxu0 0.0
        %624 = vmatpush2.msra.mxu0 0.0
        %625 = vmatprep.subr.mxu0 0.0
        %626 = vmatpush2.msra.mxu0 0.0
        %627 = vmatprep.subr.mxu0 0.0
        %628 = vmatpush2.msra.mxu0 0.0
        %629 = vmatprep.subr.mxu0 0.0
        %630 = vmatpush2.msra.mxu0 0.0
        %631 = vmatprep.subr.mxu0 0.0
        %632 = vmatpush2.msra.mxu0 0.0
        %633 = vmatprep.subr.mxu0 0.0
        %634 = vmatpush2.msra.mxu0 0.0
        %635 = vmatprep.subr.mxu0 0.0
        %636 = vmatpush2.msra.mxu0 0.0
        %637 = vmatprep.subr.mxu0 0.0
        %638 = vmatpush2.msra.mxu0 0.0
        %639 = vmatprep.subr.mxu0 0.0
        %640 = vmatpush2.msra.mxu0 0.0
        %641 = vmatprep.mubr.f32.mxu0 0.0
        %642 = vmatmul.mubr.f32.gmra.mxu0 %v464
        %v643 = vpop.f32.mrf.mxu0
        %v644 = vadd.f32 0.0, %v643
        %v645 = vpop.f32.mrf.mxu0
        %646 = vmatprep.mubr.f32.mxu0 0.0
        %647 = vmatmul.mubr.f32.gmra.mxu0 %v465
        %v648 = vpop.f32.mrf.mxu0
        %v649 = vadd.f32 0.0, %v648
        %v650 = vpop.f32.mrf.mxu0
        %651 = vdwg.mxu0
        %v652 = vld [vmem:[#allocation10] sm:$0xff]
        %v653 = vld [vmem:[#allocation10 + $0x8] sm:$0xff]
        %v654 = vld [vmem:[#allocation10 + $0x10] sm:$0xff]
        %v655 = vld [vmem:[#allocation10 + $0x18] sm:$0xff]
        %v656 = vld [vmem:[#allocation10 + $0x20] sm:$0xff]
        %v657 = vld [vmem:[#allocation10 + $0x28] sm:$0xff]
        %v658 = vld [vmem:[#allocation10 + $0x30] sm:$0xff]
        %v659 = vld [vmem:[#allocation10 + $0x38] sm:$0xff]
        %v660 = vld [vmem:[#allocation10 + $0x40] sm:$0xff]
        %v661 = vld [vmem:[#allocation10 + $0x48] sm:$0xff]
        %v662 = vld [vmem:[#allocation10 + $0x50] sm:$0xff]
        %v663 = vld [vmem:[#allocation10 + $0x58] sm:$0xff]
        %v664 = vld [vmem:[#allocation10 + $0x60] sm:$0xff]
        %v665 = vld [vmem:[#allocation10 + $0x68] sm:$0xff]
        %v666 = vld [vmem:[#allocation10 + $0x70] sm:$0xff]
        %v667 = vld [vmem:[#allocation10 + $0x78] sm:$0xff]
        %668 = vmatprep.subr.mxu0 0.0
        %669 = vmatpush1.msra.mxu0 %v667
        %670 = vmatprep.subr.mxu0 0.0
        %671 = vmatpush1.msra.mxu0 %v666
        %672 = vmatprep.subr.mxu0 0.0
        %673 = vmatpush1.msra.mxu0 %v665
        %674 = vmatprep.subr.mxu0 0.0
        %675 = vmatpush1.msra.mxu0 %v664
        %676 = vmatprep.subr.mxu0 0.0
        %677 = vmatpush1.msra.mxu0 %v663
        %678 = vmatprep.subr.mxu0 0.0
        %679 = vmatpush1.msra.mxu0 %v662
        %680 = vmatprep.subr.mxu0 0.0
        %681 = vmatpush1.msra.mxu0 %v661
        %682 = vmatprep.subr.mxu0 0.0
        %683 = vmatpush1.msra.mxu0 %v660
        %684 = vmatprep.subr.mxu0 0.0
        %685 = vmatpush1.msra.mxu0 %v659
        %686 = vmatprep.subr.mxu0 0.0
        %687 = vmatpush1.msra.mxu0 %v658
        %688 = vmatprep.subr.mxu0 0.0
        %689 = vmatpush1.msra.mxu0 %v657
        %690 = vmatprep.subr.mxu0 0.0
        %691 = vmatpush1.msra.mxu0 %v656
        %692 = vmatprep.subr.mxu0 0.0
        %693 = vmatpush1.msra.mxu0 %v655
        %694 = vmatprep.subr.mxu0 0.0
        %695 = vmatpush1.msra.mxu0 %v654
        %696 = vmatprep.subr.mxu0 0.0
        %697 = vmatpush1.msra.mxu0 %v653
        %698 = vmatprep.subr.mxu0 0.0
        %699 = vmatpush1.msra.mxu0 %v652
        %700 = vmatprep.subr.mxu0 0.0
        %701 = vmatpush2.msra.mxu0 0.0
        %702 = vmatprep.subr.mxu0 0.0
        %703 = vmatpush2.msra.mxu0 0.0
        %704 = vmatprep.subr.mxu0 0.0
        %705 = vmatpush2.msra.mxu0 0.0
        %706 = vmatprep.subr.mxu0 0.0
        %707 = vmatpush2.msra.mxu0 0.0
        %708 = vmatprep.subr.mxu0 0.0
        %709 = vmatpush2.msra.mxu0 0.0
        %710 = vmatprep.subr.mxu0 0.0
        %711 = vmatpush2.msra.mxu0 0.0
        %712 = vmatprep.subr.mxu0 0.0
        %713 = vmatpush2.msra.mxu0 0.0
        %714 = vmatprep.subr.mxu0 0.0
        %715 = vmatpush2.msra.mxu0 0.0
        %716 = vmatprep.subr.mxu0 0.0
        %717 = vmatpush2.msra.mxu0 0.0
        %718 = vmatprep.subr.mxu0 0.0
        %719 = vmatpush2.msra.mxu0 0.0
        %720 = vmatprep.subr.mxu0 0.0
        %721 = vmatpush2.msra.mxu0 0.0
        %722 = vmatprep.subr.mxu0 0.0
        %723 = vmatpush2.msra.mxu0 0.0
        %724 = vmatprep.subr.mxu0 0.0
        %725 = vmatpush2.msra.mxu0 0.0
        %726 = vmatprep.subr.mxu0 0.0
        %727 = vmatpush2.msra.mxu0 0.0
        %728 = vmatprep.subr.mxu0 0.0
        %729 = vmatpush2.msra.mxu0 0.0
        %730 = vmatprep.subr.mxu0 0.0
        %731 = vmatpush2.msra.mxu0 0.0
        %732 = vmatprep.mubr.f32.mxu0 0.0
        %733 = vmatmul.mubr.f32.gmra.mxu0 %v466
        %v734 = vpop.f32.mrf.mxu0
        %v735 = vadd.f32 0.0, %v734
        %v736 = vpop.f32.mrf.mxu0
        %737 = vmatprep.mubr.f32.mxu0 0.0
        %738 = vmatmul.mubr.f32.gmra.mxu0 %v467
        %v739 = vpop.f32.mrf.mxu0
        %v740 = vadd.f32 0.0, %v739
        %v741 = vpop.f32.mrf.mxu0
        %742 = vdwg.mxu0
        %vm743 = vcmask 130048
        %v745 = vsel %vm743, %v553, 0
        %v748 = vsel %vm743, %v558, 0
        %v751 = vsel %vm743, %v644, 0
        %v754 = vsel %vm743, %v649, 0
        %756 = vmatprep.subr.mxu0 0.0
        %757 = vmatpush1.xpose.msra.mxu0 0.0
        %758 = vmatprep.subr.mxu0 0.0
        %759 = vmatpush1.xpose.msra.mxu0 0.0
        %760 = vmatprep.subr.mxu0 0.0
        %761 = vmatpush1.xpose.msra.mxu0 0.0
        %762 = vmatprep.subr.mxu0 0.0
        %763 = vmatpush1.xpose.msra.mxu0 0.0
        %764 = vmatprep.subr.mxu0 0.0
        %765 = vmatpush1.xpose.msra.mxu0 0.0
        %766 = vmatprep.subr.mxu0 0.0
        %767 = vmatpush1.xpose.msra.mxu0 0.0
        %768 = vmatprep.subr.mxu0 0.0
        %769 = vmatpush1.xpose.msra.mxu0 0.0
        %770 = vmatprep.subr.mxu0 0.0
        %771 = vmatpush1.xpose.msra.mxu0 0.0
        %772 = vmatprep.subr.mxu0 0.0
        %773 = vmatpush1.xpose.msra.mxu0 0.0
        %774 = vmatprep.subr.mxu0 0.0
        %775 = vmatpush1.xpose.msra.mxu0 0.0
        %776 = vmatprep.subr.mxu0 0.0
        %777 = vmatpush1.xpose.msra.mxu0 0.0
        %778 = vmatprep.subr.mxu0 0.0
        %779 = vmatpush1.xpose.msra.mxu0 0.0
        %780 = vmatprep.subr.mxu0 0.0
        %781 = vmatpush1.xpose.msra.mxu0 0.0
        %782 = vmatprep.subr.mxu0 0.0
        %783 = vmatpush1.xpose.msra.mxu0 0.0
        %784 = vmatprep.subr.mxu0 0.0
        %785 = vmatpush1.xpose.msra.mxu0 %v754
        %786 = vmatprep.subr.mxu0 0.0
        %787 = vmatpush1.xpose.msra.mxu0 %v751
        %788 = vmatprep.subr.mxu0 0.0
        %789 = vmatpush2.xpose.msra.mxu0 0.0
        %790 = vmatprep.subr.mxu0 0.0
        %791 = vmatpush2.xpose.msra.mxu0 0.0
        %792 = vmatprep.subr.mxu0 0.0
        %793 = vmatpush2.xpose.msra.mxu0 0.0
        %794 = vmatprep.subr.mxu0 0.0
        %795 = vmatpush2.xpose.msra.mxu0 0.0
        %796 = vmatprep.subr.mxu0 0.0
        %797 = vmatpush2.xpose.msra.mxu0 0.0
        %798 = vmatprep.subr.mxu0 0.0
        %799 = vmatpush2.xpose.msra.mxu0 0.0
        %800 = vmatprep.subr.mxu0 0.0
        %801 = vmatpush2.xpose.msra.mxu0 0.0
        %802 = vmatprep.subr.mxu0 0.0
        %803 = vmatpush2.xpose.msra.mxu0 0.0
        %804 = vmatprep.subr.mxu0 0.0
        %805 = vmatpush2.xpose.msra.mxu0 0.0
        %806 = vmatprep.subr.mxu0 0.0
        %807 = vmatpush2.xpose.msra.mxu0 0.0
        %808 = vmatprep.subr.mxu0 0.0
        %809 = vmatpush2.xpose.msra.mxu0 0.0
        %810 = vmatprep.subr.mxu0 0.0
        %811 = vmatpush2.xpose.msra.mxu0 0.0
        %812 = vmatprep.subr.mxu0 0.0
        %813 = vmatpush2.xpose.msra.mxu0 0.0
        %814 = vmatprep.subr.mxu0 0.0
        %815 = vmatpush2.xpose.msra.mxu0 0.0
        %816 = vmatprep.subr.mxu0 0.0
        %817 = vmatpush2.xpose.msra.mxu0 0.0
        %818 = vmatprep.subr.mxu0 0.0
        %819 = vmatpush2.xpose.msra.mxu0 0.0
        %820 = vmatprep.mubr.f32.mxu0 0.0
        %821 = vmatmul.mubr.f32.gmra.mxu0 %v745
        %v822 = vpop.f32.mrf.mxu0
        %v823 = vadd.f32 0.0, %v822
        %v824 = vpop.f32.mrf.mxu0
        %825 = vmatprep.mubr.f32.mxu0 0.0
        %826 = vmatmul.mubr.f32.gmra.mxu0 %v748
        %v827 = vpop.f32.mrf.mxu0
        %v828 = vadd.f32 0.0, %v827
        %v829 = vpop.f32.mrf.mxu0
        %830 = vdwg.mxu0
        %v831 = vmul.f32 %v823, 0.25
        %v832 = vmul.f32 %v828, 0.25
        %vm833 = vcmp.eq.s32.totalorder %v468, 0
        %vm834 = vcmp.eq.s32.totalorder %v469, 0
        %v835 = vsel %vm833, -1e+09, %v831
        %v836 = vsel %vm834, -1e+09, %v832
        %v837 = vsel %vm743, %v835, -inf
        %838 = vmax.xlane.f32.xlu0 %v837
        %v839 = vpop.xlane.xlu0 %838
        %v840 = vsel %vm743, %v836, -inf
        %841 = vmax.xlane.f32.xlu0 %v840
        %v842 = vpop.xlane.xlu0 %841
        %v843 = vsub.f32 %v835, %v839
        %v844 = vsub.f32 %v836, %v842
        %v845 = vmul.f32 %v843, 1.442695
        %v846 = vpow.pop %v845
        %v847 = vmul.f32 %v844, 1.442695
        %v848 = vpow.pop %v847
        %v849 = vsel %vm743, %v846, 0.0
        %850 = vadd.xlane.f32.xlu0 %v849
        %v851 = vpop.xlane.xlu0 %850
        %v852 = vsel %vm743, %v848, 0.0
        %853 = vadd.xlane.f32.xlu0 %v852
        %v854 = vpop.xlane.xlu0 %853
        %v855 = vrcp.pop %v851
        %v856 = vmul.f32 %v846, %v855
        %v857 = vrcp.pop %v854
        %v858 = vmul.f32 %v848, %v857
        %v860 = vsel %vm743, %v856, 0
        %v863 = vsel %vm743, %v858, 0
        %865 = vmatprep.subr.mxu0 0.0
        %866 = vmatpush1.msra.mxu0 0.0
        %867 = vmatprep.subr.mxu0 0.0
        %868 = vmatpush1.msra.mxu0 0.0
        %869 = vmatprep.subr.mxu0 0.0
        %870 = vmatpush1.msra.mxu0 0.0
        %871 = vmatprep.subr.mxu0 0.0
        %872 = vmatpush1.msra.mxu0 0.0
        %873 = vmatprep.subr.mxu0 0.0
        %874 = vmatpush1.msra.mxu0 0.0
        %875 = vmatprep.subr.mxu0 0.0
        %876 = vmatpush1.msra.mxu0 0.0
        %877 = vmatprep.subr.mxu0 0.0
        %878 = vmatpush1.msra.mxu0 0.0
        %879 = vmatprep.subr.mxu0 0.0
        %880 = vmatpush1.msra.mxu0 0.0
        %881 = vmatprep.subr.mxu0 0.0
        %882 = vmatpush1.msra.mxu0 0.0
        %883 = vmatprep.subr.mxu0 0.0
        %884 = vmatpush1.msra.mxu0 0.0
        %885 = vmatprep.subr.mxu0 0.0
        %886 = vmatpush1.msra.mxu0 0.0
        %887 = vmatprep.subr.mxu0 0.0
        %888 = vmatpush1.msra.mxu0 0.0
        %889 = vmatprep.subr.mxu0 0.0
        %890 = vmatpush1.msra.mxu0 0.0
        %891 = vmatprep.subr.mxu0 0.0
        %892 = vmatpush1.msra.mxu0 0.0
        %893 = vmatprep.subr.mxu0 0.0
        %894 = vmatpush1.msra.mxu0 %v740
        %895 = vmatprep.subr.mxu0 0.0
        %896 = vmatpush1.msra.mxu0 %v735
        %897 = vmatprep.subr.mxu0 0.0
        %898 = vmatpush2.msra.mxu0 0.0
        %899 = vmatprep.subr.mxu0 0.0
        %900 = vmatpush2.msra.mxu0 0.0
        %901 = vmatprep.subr.mxu0 0.0
        %902 = vmatpush2.msra.mxu0 0.0
        %903 = vmatprep.subr.mxu0 0.0
        %904 = vmatpush2.msra.mxu0 0.0
        %905 = vmatprep.subr.mxu0 0.0
        %906 = vmatpush2.msra.mxu0 0.0
        %907 = vmatprep.subr.mxu0 0.0
        %908 = vmatpush2.msra.mxu0 0.0
        %909 = vmatprep.subr.mxu0 0.0
        %910 = vmatpush2.msra.mxu0 0.0
        %911 = vmatprep.subr.mxu0 0.0
        %912 = vmatpush2.msra.mxu0 0.0
        %913 = vmatprep.subr.mxu0 0.0
        %914 = vmatpush2.msra.mxu0 0.0
        %915 = vmatprep.subr.mxu0 0.0
        %916 = vmatpush2.msra.mxu0 0.0
        %917 = vmatprep.subr.mxu0 0.0
        %918 = vmatpush2.msra.mxu0 0.0
        %919 = vmatprep.subr.mxu0 0.0
        %920 = vmatpush2.msra.mxu0 0.0
        %921 = vmatprep.subr.mxu0 0.0
        %922 = vmatpush2.msra.mxu0 0.0
        %923 = vmatprep.subr.mxu0 0.0
        %924 = vmatpush2.msra.mxu0 0.0
        %925 = vmatprep.subr.mxu0 0.0
        %926 = vmatpush2.msra.mxu0 0.0
        %927 = vmatprep.subr.mxu0 0.0
        %928 = vmatpush2.msra.mxu0 0.0
        %929 = vmatprep.mubr.f32.mxu0 0.0
        %930 = vmatmul.mubr.f32.gmra.mxu0 %v860
        %v931 = vpop.f32.mrf.mxu0
        %v932 = vadd.f32 0.0, %v931
        %v933 = vpop.f32.mrf.mxu0
        %934 = vmatprep.mubr.f32.mxu0 0.0
        %935 = vmatmul.mubr.f32.gmra.mxu0 %v863
        %v936 = vpop.f32.mrf.mxu0
        %v937 = vadd.f32 0.0, %v936
        %v938 = vpop.f32.mrf.mxu0
        %939 = vdwg.mxu0
        %940 = vrot.lane.b32.xlu0 %v553, 112
        %v941 = vpop.permute.xlu0 %940
        %942 = vrot.lane.b32.xlu0 %v558, 112
        %v943 = vpop.permute.xlu0 %942
        %944 = vrot.lane.b32.xlu0 %v644, 112
        %v945 = vpop.permute.xlu0 %944
        %946 = vrot.lane.b32.xlu0 %v649, 112
        %v947 = vpop.permute.xlu0 %946
        %v948 = vsel %vm743, %v941, 0
        %v950 = vsel %vm743, %v943, 0
        %v952 = vsel %vm743, %v945, 0
        %v954 = vsel %vm743, %v947, 0
        %956 = vmatprep.subr.mxu0 0.0
        %957 = vmatpush1.xpose.msra.mxu0 0.0
        %958 = vmatprep.subr.mxu0 0.0
        %959 = vmatpush1.xpose.msra.mxu0 0.0
        %960 = vmatprep.subr.mxu0 0.0
        %961 = vmatpush1.xpose.msra.mxu0 0.0
        %962 = vmatprep.subr.mxu0 0.0
        %963 = vmatpush1.xpose.msra.mxu0 0.0
        %964 = vmatprep.subr.mxu0 0.0
        %965 = vmatpush1.xpose.msra.mxu0 0.0
        %966 = vmatprep.subr.mxu0 0.0
        %967 = vmatpush1.xpose.msra.mxu0 0.0
        %968 = vmatprep.subr.mxu0 0.0
        %969 = vmatpush1.xpose.msra.mxu0 0.0
        %970 = vmatprep.subr.mxu0 0.0
        %971 = vmatpush1.xpose.msra.mxu0 0.0
        %972 = vmatprep.subr.mxu0 0.0
        %973 = vmatpush1.xpose.msra.mxu0 0.0
        %974 = vmatprep.subr.mxu0 0.0
        %975 = vmatpush1.xpose.msra.mxu0 0.0
        %976 = vmatprep.subr.mxu0 0.0
        %977 = vmatpush1.xpose.msra.mxu0 0.0
        %978 = vmatprep.subr.mxu0 0.0
        %979 = vmatpush1.xpose.msra.mxu0 0.0
        %980 = vmatprep.subr.mxu0 0.0
        %981 = vmatpush1.xpose.msra.mxu0 0.0
        %982 = vmatprep.subr.mxu0 0.0
        %983 = vmatpush1.xpose.msra.mxu0 0.0
        %984 = vmatprep.subr.mxu0 0.0
        %985 = vmatpush1.xpose.msra.mxu0 %v954
        %986 = vmatprep.subr.mxu0 0.0
        %987 = vmatpush1.xpose.msra.mxu0 %v952
        %988 = vmatprep.subr.mxu0 0.0
        %989 = vmatpush2.xpose.msra.mxu0 0.0
        %990 = vmatprep.subr.mxu0 0.0
        %991 = vmatpush2.xpose.msra.mxu0 0.0
        %992 = vmatprep.subr.mxu0 0.0
        %993 = vmatpush2.xpose.msra.mxu0 0.0
        %994 = vmatprep.subr.mxu0 0.0
        %995 = vmatpush2.xpose.msra.mxu0 0.0
        %996 = vmatprep.subr.mxu0 0.0
        %997 = vmatpush2.xpose.msra.mxu0 0.0
        %998 = vmatprep.subr.mxu0 0.0
        %999 = vmatpush2.xpose.msra.mxu0 0.0
        %1000 = vmatprep.subr.mxu0 0.0
        %1001 = vmatpush2.xpose.msra.mxu0 0.0
        %1002 = vmatprep.subr.mxu0 0.0
        %1003 = vmatpush2.xpose.msra.mxu0 0.0
        %1004 = vmatprep.subr.mxu0 0.0
        %1005 = vmatpush2.xpose.msra.mxu0 0.0
        %1006 = vmatprep.subr.mxu0 0.0
        %1007 = vmatpush2.xpose.msra.mxu0 0.0
        %1008 = vmatprep.subr.mxu0 0.0
        %1009 = vmatpush2.xpose.msra.mxu0 0.0
        %1010 = vmatprep.subr.mxu0 0.0
        %1011 = vmatpush2.xpose.msra.mxu0 0.0
        %1012 = vmatprep.subr.mxu0 0.0
        %1013 = vmatpush2.xpose.msra.mxu0 0.0
        %1014 = vmatprep.subr.mxu0 0.0
        %1015 = vmatpush2.xpose.msra.mxu0 0.0
        %1016 = vmatprep.subr.mxu0 0.0
        %1017 = vmatpush2.xpose.msra.mxu0 0.0
        %1018 = vmatprep.subr.mxu0 0.0
        %1019 = vmatpush2.xpose.msra.mxu0 0.0
        %1020 = vmatprep.mubr.f32.mxu0 0.0
        %1021 = vmatmul.mubr.f32.gmra.mxu0 %v948
        %v1022 = vpop.f32.mrf.mxu0
        %v1023 = vadd.f32 0.0, %v1022
        %v1024 = vpop.f32.mrf.mxu0
        %1025 = vmatprep.mubr.f32.mxu0 0.0
        %1026 = vmatmul.mubr.f32.gmra.mxu0 %v950
        %v1027 = vpop.f32.mrf.mxu0
        %v1028 = vadd.f32 0.0, %v1027
        %v1029 = vpop.f32.mrf.mxu0
        %1030 = vdwg.mxu0
        %v1031 = vmul.f32 %v1023, 0.25
        %v1032 = vmul.f32 %v1028, 0.25
        %v1033 = vsel %vm833, -1e+09, %v1031
        %v1034 = vsel %vm834, -1e+09, %v1032
        %v1035 = vsel %vm743, %v1033, -inf
        %1036 = vmax.xlane.f32.xlu0 %v1035
        %v1037 = vpop.xlane.xlu0 %1036
        %v1038 = vsel %vm743, %v1034, -inf
        %1039 = vmax.xlane.f32.xlu0 %v1038
        %v1040 = vpop.xlane.xlu0 %1039
        %v1041 = vsub.f32 %v1033, %v1037
        %v1042 = vsub.f32 %v1034, %v1040
        %v1043 = vmul.f32 %v1041, 1.442695
        %v1044 = vpow.pop %v1043
        %v1045 = vmul.f32 %v1042, 1.442695
        %v1046 = vpow.pop %v1045
        %v1047 = vsel %vm743, %v1044, 0.0
        %1048 = vadd.xlane.f32.xlu0 %v1047
        %v1049 = vpop.xlane.xlu0 %1048
        %v1050 = vsel %vm743, %v1046, 0.0
        %1051 = vadd.xlane.f32.xlu0 %v1050
        %v1052 = vpop.xlane.xlu0 %1051
        %v1053 = vrcp.pop %v1049
        %v1054 = vmul.f32 %v1044, %v1053
        %v1055 = vrcp.pop %v1052
        %v1056 = vmul.f32 %v1046, %v1055
        %1059 = vrot.lane.b32.xlu0 %v735, 112
        %v1060 = vpop.permute.xlu0 %1059
        %1061 = vrot.lane.b32.xlu0 %v740, 112
        %v1062 = vpop.permute.xlu0 %1061
        %v1066 = vsel %vm743, %v1054, 0
        %v1069 = vsel %vm743, %v1056, 0
        %1071 = vmatprep.subr.mxu0 0.0
        %1072 = vmatpush1.msra.mxu0 0.0
        %1073 = vmatprep.subr.mxu0 0.0
        %1074 = vmatpush1.msra.mxu0 0.0
        %1075 = vmatprep.subr.mxu0 0.0
        %1076 = vmatpush1.msra.mxu0 0.0
        %1077 = vmatprep.subr.mxu0 0.0
        %1078 = vmatpush1.msra.mxu0 0.0
        %1079 = vmatprep.subr.mxu0 0.0
        %1080 = vmatpush1.msra.mxu0 0.0
        %1081 = vmatprep.subr.mxu0 0.0
        %1082 = vmatpush1.msra.mxu0 0.0
        %1083 = vmatprep.subr.mxu0 0.0
        %1084 = vmatpush1.msra.mxu0 0.0
        %1085 = vmatprep.subr.mxu0 0.0
        %1086 = vmatpush1.msra.mxu0 0.0
        %1087 = vmatprep.subr.mxu0 0.0
        %1088 = vmatpush1.msra.mxu0 0.0
        %1089 = vmatprep.subr.mxu0 0.0
        %1090 = vmatpush1.msra.mxu0 0.0
        %1091 = vmatprep.subr.mxu0 0.0
        %1092 = vmatpush1.msra.mxu0 0.0
        %1093 = vmatprep.subr.mxu0 0.0
        %1094 = vmatpush1.msra.mxu0 0.0
        %1095 = vmatprep.subr.mxu0 0.0
        %1096 = vmatpush1.msra.mxu0 0.0
        %1097 = vmatprep.subr.mxu0 0.0
        %1098 = vmatpush1.msra.mxu0 0.0
        %1099 = vmatprep.subr.mxu0 0.0
        %1100 = vmatpush1.msra.mxu0 %v1062
        %1101 = vmatprep.subr.mxu0 0.0
        %1102 = vmatpush1.msra.mxu0 %v1060
        %1103 = vmatprep.subr.mxu0 0.0
        %1104 = vmatpush2.msra.mxu0 0.0
        %1105 = vmatprep.subr.mxu0 0.0
        %1106 = vmatpush2.msra.mxu0 0.0
        %1107 = vmatprep.subr.mxu0 0.0
        %1108 = vmatpush2.msra.mxu0 0.0
        %1109 = vmatprep.subr.mxu0 0.0
        %1110 = vmatpush2.msra.mxu0 0.0
        %1111 = vmatprep.subr.mxu0 0.0
        %1112 = vmatpush2.msra.mxu0 0.0
        %1113 = vmatprep.subr.mxu0 0.0
        %1114 = vmatpush2.msra.mxu0 0.0
        %1115 = vmatprep.subr.mxu0 0.0
        %1116 = vmatpush2.msra.mxu0 0.0
        %1117 = vmatprep.subr.mxu0 0.0
        %1118 = vmatpush2.msra.mxu0 0.0
        %1119 = vmatprep.subr.mxu0 0.0
        %1120 = vmatpush2.msra.mxu0 0.0
        %1121 = vmatprep.subr.mxu0 0.0
        %1122 = vmatpush2.msra.mxu0 0.0
        %1123 = vmatprep.subr.mxu0 0.0
        %1124 = vmatpush2.msra.mxu0 0.0
        %1125 = vmatprep.subr.mxu0 0.0
        %1126 = vmatpush2.msra.mxu0 0.0
        %1127 = vmatprep.subr.mxu0 0.0
        %1128 = vmatpush2.msra.mxu0 0.0
        %1129 = vmatprep.subr.mxu0 0.0
        %1130 = vmatpush2.msra.mxu0 0.0
        %1131 = vmatprep.subr.mxu0 0.0
        %1132 = vmatpush2.msra.mxu0 0.0
        %1133 = vmatprep.subr.mxu0 0.0
        %1134 = vmatpush2.msra.mxu0 0.0
        %1135 = vmatprep.mubr.f32.mxu0 0.0
        %1136 = vmatmul.mubr.f32.gmra.mxu0 %v1066
        %v1137 = vpop.f32.mrf.mxu0
        %v1138 = vadd.f32 0.0, %v1137
        %v1139 = vpop.f32.mrf.mxu0
        %1140 = vmatprep.mubr.f32.mxu0 0.0
        %1141 = vmatmul.mubr.f32.gmra.mxu0 %v1069
        %v1142 = vpop.f32.mrf.mxu0
        %v1143 = vadd.f32 0.0, %v1142
        %v1144 = vpop.f32.mrf.mxu0
        %1145 = vdwg.mxu0
        %1146 = vrot.lane.b32.xlu0 %v553, 96
        %v1147 = vpop.permute.xlu0 %1146
        %1148 = vrot.lane.b32.xlu0 %v558, 96
        %v1149 = vpop.permute.xlu0 %1148
        %1150 = vrot.lane.b32.xlu0 %v644, 96
        %v1151 = vpop.permute.xlu0 %1150
        %1152 = vrot.lane.b32.xlu0 %v649, 96
        %v1153 = vpop.permute.xlu0 %1152
        %v1154 = vsel %vm743, %v1147, 0
        %v1156 = vsel %vm743, %v1149, 0
        %v1158 = vsel %vm743, %v1151, 0
        %v1160 = vsel %vm743, %v1153, 0
        %1162 = vmatprep.subr.mxu0 0.0
        %1163 = vmatpush1.xpose.msra.mxu0 0.0
        %1164 = vmatprep.subr.mxu0 0.0
        %1165 = vmatpush1.xpose.msra.mxu0 0.0
        %1166 = vmatprep.subr.mxu0 0.0
        %1167 = vmatpush1.xpose.msra.mxu0 0.0
        %1168 = vmatprep.subr.mxu0 0.0
        %1169 = vmatpush1.xpose.msra.mxu0 0.0
        %1170 = vmatprep.subr.mxu0 0.0
        %1171 = vmatpush1.xpose.msra.mxu0 0.0
        %1172 = vmatprep.subr.mxu0 0.0
        %1173 = vmatpush1.xpose.msra.mxu0 0.0
        %1174 = vmatprep.subr.mxu0 0.0
        %1175 = vmatpush1.xpose.msra.mxu0 0.0
        %1176 = vmatprep.subr.mxu0 0.0
        %1177 = vmatpush1.xpose.msra.mxu0 0.0
        %1178 = vmatprep.subr.mxu0 0.0
        %1179 = vmatpush1.xpose.msra.mxu0 0.0
        %1180 = vmatprep.subr.mxu0 0.0
        %1181 = vmatpush1.xpose.msra.mxu0 0.0
        %1182 = vmatprep.subr.mxu0 0.0
        %1183 = vmatpush1.xpose.msra.mxu0 0.0
        %1184 = vmatprep.subr.mxu0 0.0
        %1185 = vmatpush1.xpose.msra.mxu0 0.0
        %1186 = vmatprep.subr.mxu0 0.0
        %1187 = vmatpush1.xpose.msra.mxu0 0.0
        %1188 = vmatprep.subr.mxu0 0.0
        %1189 = vmatpush1.xpose.msra.mxu0 0.0
        %1190 = vmatprep.subr.mxu0 0.0
        %1191 = vmatpush1.xpose.msra.mxu0 %v1160
        %1192 = vmatprep.subr.mxu0 0.0
        %1193 = vmatpush1.xpose.msra.mxu0 %v1158
        %1194 = vmatprep.subr.mxu0 0.0
        %1195 = vmatpush2.xpose.msra.mxu0 0.0
        %1196 = vmatprep.subr.mxu0 0.0
        %1197 = vmatpush2.xpose.msra.mxu0 0.0
        %1198 = vmatprep.subr.mxu0 0.0
        %1199 = vmatpush2.xpose.msra.mxu0 0.0
        %1200 = vmatprep.subr.mxu0 0.0
        %1201 = vmatpush2.xpose.msra.mxu0 0.0
        %1202 = vmatprep.subr.mxu0 0.0
        %1203 = vmatpush2.xpose.msra.mxu0 0.0
        %1204 = vmatprep.subr.mxu0 0.0
        %1205 = vmatpush2.xpose.msra.mxu0 0.0
        %1206 = vmatprep.subr.mxu0 0.0
        %1207 = vmatpush2.xpose.msra.mxu0 0.0
        %1208 = vmatprep.subr.mxu0 0.0
        %1209 = vmatpush2.xpose.msra.mxu0 0.0
        %1210 = vmatprep.subr.mxu0 0.0
        %1211 = vmatpush2.xpose.msra.mxu0 0.0
        %1212 = vmatprep.subr.mxu0 0.0
        %1213 = vmatpush2.xpose.msra.mxu0 0.0
        %1214 = vmatprep.subr.mxu0 0.0
        %1215 = vmatpush2.xpose.msra.mxu0 0.0
        %1216 = vmatprep.subr.mxu0 0.0
        %1217 = vmatpush2.xpose.msra.mxu0 0.0
        %1218 = vmatprep.subr.mxu0 0.0
        %1219 = vmatpush2.xpose.msra.mxu0 0.0
        %1220 = vmatprep.subr.mxu0 0.0
        %1221 = vmatpush2.xpose.msra.mxu0 0.0
        %1222 = vmatprep.subr.mxu0 0.0
        %1223 = vmatpush2.xpose.msra.mxu0 0.0
        %1224 = vmatprep.subr.mxu0 0.0
        %1225 = vmatpush2.xpose.msra.mxu0 0.0
        %1226 = vmatprep.mubr.f32.mxu0 0.0
        %1227 = vmatmul.mubr.f32.gmra.mxu0 %v1154
        %v1228 = vpop.f32.mrf.mxu0
        %v1229 = vadd.f32 0.0, %v1228
        %v1230 = vpop.f32.mrf.mxu0
        %1231 = vmatprep.mubr.f32.mxu0 0.0
        %1232 = vmatmul.mubr.f32.gmra.mxu0 %v1156
        %v1233 = vpop.f32.mrf.mxu0
        %v1234 = vadd.f32 0.0, %v1233
        %v1235 = vpop.f32.mrf.mxu0
        %1236 = vdwg.mxu0
        %v1237 = vmul.f32 %v1229, 0.25
        %v1238 = vmul.f32 %v1234, 0.25
        %v1239 = vsel %vm833, -1e+09, %v1237
        %v1240 = vsel %vm834, -1e+09, %v1238
        %v1241 = vsel %vm743, %v1239, -inf
        %1242 = vmax.xlane.f32.xlu0 %v1241
        %v1243 = vpop.xlane.xlu0 %1242
        %v1244 = vsel %vm743, %v1240, -inf
        %1245 = vmax.xlane.f32.xlu0 %v1244
        %v1246 = vpop.xlane.xlu0 %1245
        %v1247 = vsub.f32 %v1239, %v1243
        %v1248 = vsub.f32 %v1240, %v1246
        %v1249 = vmul.f32 %v1247, 1.442695
        %v1250 = vpow.pop %v1249
        %v1251 = vmul.f32 %v1248, 1.442695
        %v1252 = vpow.pop %v1251
        %v1253 = vsel %vm743, %v1250, 0.0
        %1254 = vadd.xlane.f32.xlu0 %v1253
        %v1255 = vpop.xlane.xlu0 %1254
        %v1256 = vsel %vm743, %v1252, 0.0
        %1257 = vadd.xlane.f32.xlu0 %v1256
        %v1258 = vpop.xlane.xlu0 %1257
        %v1259 = vrcp.pop %v1255
        %v1260 = vmul.f32 %v1250, %v1259
        %v1261 = vrcp.pop %v1258
        %v1262 = vmul.f32 %v1252, %v1261
        %1263 = vrot.lane.b32.xlu0 %v735, 96
        %v1264 = vpop.permute.xlu0 %1263
        %1265 = vrot.lane.b32.xlu0 %v740, 96
        %v1266 = vpop.permute.xlu0 %1265
        %v1270 = vsel %vm743, %v1260, 0
        %v1273 = vsel %vm743, %v1262, 0
        %1275 = vmatprep.subr.mxu0 0.0
        %1276 = vmatpush1.msra.mxu0 0.0
        %1277 = vmatprep.subr.mxu0 0.0
        %1278 = vmatpush1.msra.mxu0 0.0
        %1279 = vmatprep.subr.mxu0 0.0
        %1280 = vmatpush1.msra.mxu0 0.0
        %1281 = vmatprep.subr.mxu0 0.0
        %1282 = vmatpush1.msra.mxu0 0.0
        %1283 = vmatprep.subr.mxu0 0.0
        %1284 = vmatpush1.msra.mxu0 0.0
        %1285 = vmatprep.subr.mxu0 0.0
        %1286 = vmatpush1.msra.mxu0 0.0
        %1287 = vmatprep.subr.mxu0 0.0
        %1288 = vmatpush1.msra.mxu0 0.0
        %1289 = vmatprep.subr.mxu0 0.0
        %1290 = vmatpush1.msra.mxu0 0.0
        %1291 = vmatprep.subr.mxu0 0.0
        %1292 = vmatpush1.msra.mxu0 0.0
        %1293 = vmatprep.subr.mxu0 0.0
        %1294 = vmatpush1.msra.mxu0 0.0
        %1295 = vmatprep.subr.mxu0 0.0
        %1296 = vmatpush1.msra.mxu0 0.0
        %1297 = vmatprep.subr.mxu0 0.0
        %1298 = vmatpush1.msra.mxu0 0.0
        %1299 = vmatprep.subr.mxu0 0.0
        %1300 = vmatpush1.msra.mxu0 0.0
        %1301 = vmatprep.subr.mxu0 0.0
        %1302 = vmatpush1.msra.mxu0 0.0
        %1303 = vmatprep.subr.mxu0 0.0
        %1304 = vmatpush1.msra.mxu0 %v1266
        %1305 = vmatprep.subr.mxu0 0.0
        %1306 = vmatpush1.msra.mxu0 %v1264
        %1307 = vmatprep.subr.mxu0 0.0
        %1308 = vmatpush2.msra.mxu0 0.0
        %1309 = vmatprep.subr.mxu0 0.0
        %1310 = vmatpush2.msra.mxu0 0.0
        %1311 = vmatprep.subr.mxu0 0.0
        %1312 = vmatpush2.msra.mxu0 0.0
        %1313 = vmatprep.subr.mxu0 0.0
        %1314 = vmatpush2.msra.mxu0 0.0
        %1315 = vmatprep.subr.mxu0 0.0
        %1316 = vmatpush2.msra.mxu0 0.0
        %1317 = vmatprep.subr.mxu0 0.0
        %1318 = vmatpush2.msra.mxu0 0.0
        %1319 = vmatprep.subr.mxu0 0.0
        %1320 = vmatpush2.msra.mxu0 0.0
        %1321 = vmatprep.subr.mxu0 0.0
        %1322 = vmatpush2.msra.mxu0 0.0
        %1323 = vmatprep.subr.mxu0 0.0
        %1324 = vmatpush2.msra.mxu0 0.0
        %1325 = vmatprep.subr.mxu0 0.0
        %1326 = vmatpush2.msra.mxu0 0.0
        %1327 = vmatprep.subr.mxu0 0.0
        %1328 = vmatpush2.msra.mxu0 0.0
        %1329 = vmatprep.subr.mxu0 0.0
        %1330 = vmatpush2.msra.mxu0 0.0
        %1331 = vmatprep.subr.mxu0 0.0
        %1332 = vmatpush2.msra.mxu0 0.0
        %1333 = vmatprep.subr.mxu0 0.0
        %1334 = vmatpush2.msra.mxu0 0.0
        %1335 = vmatprep.subr.mxu0 0.0
        %1336 = vmatpush2.msra.mxu0 0.0
        %1337 = vmatprep.subr.mxu0 0.0
        %1338 = vmatpush2.msra.mxu0 0.0
        %1339 = vmatprep.mubr.f32.mxu0 0.0
        %1340 = vmatmul.mubr.f32.gmra.mxu0 %v1270
        %v1341 = vpop.f32.mrf.mxu0
        %v1342 = vadd.f32 0.0, %v1341
        %v1343 = vpop.f32.mrf.mxu0
        %1344 = vmatprep.mubr.f32.mxu0 0.0
        %1345 = vmatmul.mubr.f32.gmra.mxu0 %v1273
        %v1346 = vpop.f32.mrf.mxu0
        %v1347 = vadd.f32 0.0, %v1346
        %v1348 = vpop.f32.mrf.mxu0
        %1349 = vdwg.mxu0
        %1350 = vrot.lane.b32.xlu0 %v553, 80
        %v1351 = vpop.permute.xlu0 %1350
        %1352 = vrot.lane.b32.xlu0 %v558, 80
        %v1353 = vpop.permute.xlu0 %1352
        %1354 = vrot.lane.b32.xlu0 %v644, 80
        %v1355 = vpop.permute.xlu0 %1354
        %1356 = vrot.lane.b32.xlu0 %v649, 80
        %v1357 = vpop.permute.xlu0 %1356
        %v1358 = vsel %vm743, %v1351, 0
        %v1360 = vsel %vm743, %v1353, 0
        %v1362 = vsel %vm743, %v1355, 0
        %v1364 = vsel %vm743, %v1357, 0
        %1366 = vmatprep.subr.mxu0 0.0
        %1367 = vmatpush1.xpose.msra.mxu0 0.0
        %1368 = vmatprep.subr.mxu0 0.0
        %1369 = vmatpush1.xpose.msra.mxu0 0.0
        %1370 = vmatprep.subr.mxu0 0.0
        %1371 = vmatpush1.xpose.msra.mxu0 0.0
        %1372 = vmatprep.subr.mxu0 0.0
        %1373 = vmatpush1.xpose.msra.mxu0 0.0
        %1374 = vmatprep.subr.mxu0 0.0
        %1375 = vmatpush1.xpose.msra.mxu0 0.0
        %1376 = vmatprep.subr.mxu0 0.0
        %1377 = vmatpush1.xpose.msra.mxu0 0.0
        %1378 = vmatprep.subr.mxu0 0.0
        %1379 = vmatpush1.xpose.msra.mxu0 0.0
        %1380 = vmatprep.subr.mxu0 0.0
        %1381 = vmatpush1.xpose.msra.mxu0 0.0
        %1382 = vmatprep.subr.mxu0 0.0
        %1383 = vmatpush1.xpose.msra.mxu0 0.0
        %1384 = vmatprep.subr.mxu0 0.0
        %1385 = vmatpush1.xpose.msra.mxu0 0.0
        %1386 = vmatprep.subr.mxu0 0.0
        %1387 = vmatpush1.xpose.msra.mxu0 0.0
        %1388 = vmatprep.subr.mxu0 0.0
        %1389 = vmatpush1.xpose.msra.mxu0 0.0
        %1390 = vmatprep.subr.mxu0 0.0
        %1391 = vmatpush1.xpose.msra.mxu0 0.0
        %1392 = vmatprep.subr.mxu0 0.0
        %1393 = vmatpush1.xpose.msra.mxu0 0.0
        %1394 = vmatprep.subr.mxu0 0.0
        %1395 = vmatpush1.xpose.msra.mxu0 %v1364
        %1396 = vmatprep.subr.mxu0 0.0
        %1397 = vmatpush1.xpose.msra.mxu0 %v1362
        %1398 = vmatprep.subr.mxu0 0.0
        %1399 = vmatpush2.xpose.msra.mxu0 0.0
        %1400 = vmatprep.subr.mxu0 0.0
        %1401 = vmatpush2.xpose.msra.mxu0 0.0
        %1402 = vmatprep.subr.mxu0 0.0
        %1403 = vmatpush2.xpose.msra.mxu0 0.0
        %1404 = vmatprep.subr.mxu0 0.0
        %1405 = vmatpush2.xpose.msra.mxu0 0.0
        %1406 = vmatprep.subr.mxu0 0.0
        %1407 = vmatpush2.xpose.msra.mxu0 0.0
        %1408 = vmatprep.subr.mxu0 0.0
        %1409 = vmatpush2.xpose.msra.mxu0 0.0
        %1410 = vmatprep.subr.mxu0 0.0
        %1411 = vmatpush2.xpose.msra.mxu0 0.0
        %1412 = vmatprep.subr.mxu0 0.0
        %1413 = vmatpush2.xpose.msra.mxu0 0.0
        %1414 = vmatprep.subr.mxu0 0.0
        %1415 = vmatpush2.xpose.msra.mxu0 0.0
        %1416 = vmatprep.subr.mxu0 0.0
        %1417 = vmatpush2.xpose.msra.mxu0 0.0
        %1418 = vmatprep.subr.mxu0 0.0
        %1419 = vmatpush2.xpose.msra.mxu0 0.0
        %1420 = vmatprep.subr.mxu0 0.0
        %1421 = vmatpush2.xpose.msra.mxu0 0.0
        %1422 = vmatprep.subr.mxu0 0.0
        %1423 = vmatpush2.xpose.msra.mxu0 0.0
        %1424 = vmatprep.subr.mxu0 0.0
        %1425 = vmatpush2.xpose.msra.mxu0 0.0
        %1426 = vmatprep.subr.mxu0 0.0
        %1427 = vmatpush2.xpose.msra.mxu0 0.0
        %1428 = vmatprep.subr.mxu0 0.0
        %1429 = vmatpush2.xpose.msra.mxu0 0.0
        %1430 = vmatprep.mubr.f32.mxu0 0.0
        %1431 = vmatmul.mubr.f32.gmra.mxu0 %v1358
        %v1432 = vpop.f32.mrf.mxu0
        %v1433 = vadd.f32 0.0, %v1432
        %v1434 = vpop.f32.mrf.mxu0
        %1435 = vmatprep.mubr.f32.mxu0 0.0
        %1436 = vmatmul.mubr.f32.gmra.mxu0 %v1360
        %v1437 = vpop.f32.mrf.mxu0
        %v1438 = vadd.f32 0.0, %v1437
        %v1439 = vpop.f32.mrf.mxu0
        %1440 = vdwg.mxu0
        %v1441 = vmul.f32 %v1433, 0.25
        %v1442 = vmul.f32 %v1438, 0.25
        %v1443 = vsel %vm833, -1e+09, %v1441
        %v1444 = vsel %vm834, -1e+09, %v1442
        %v1445 = vsel %vm743, %v1443, -inf
        %1446 = vmax.xlane.f32.xlu0 %v1445
        %v1447 = vpop.xlane.xlu0 %1446
        %v1448 = vsel %vm743, %v1444, -inf
        %1449 = vmax.xlane.f32.xlu0 %v1448
        %v1450 = vpop.xlane.xlu0 %1449
        %v1451 = vsub.f32 %v1443, %v1447
        %v1452 = vsub.f32 %v1444, %v1450
        %v1453 = vmul.f32 %v1451, 1.442695
        %v1454 = vpow.pop %v1453
        %v1455 = vmul.f32 %v1452, 1.442695
        %v1456 = vpow.pop %v1455
        %v1457 = vsel %vm743, %v1454, 0.0
        %1458 = vadd.xlane.f32.xlu0 %v1457
        %v1459 = vpop.xlane.xlu0 %1458
        %v1460 = vsel %vm743, %v1456, 0.0
        %1461 = vadd.xlane.f32.xlu0 %v1460
        %v1462 = vpop.xlane.xlu0 %1461
        %v1463 = vrcp.pop %v1459
        %v1464 = vmul.f32 %v1454, %v1463
        %v1465 = vrcp.pop %v1462
        %v1466 = vmul.f32 %v1456, %v1465
        %1467 = vrot.lane.b32.xlu0 %v735, 80
        %v1468 = vpop.permute.xlu0 %1467
        %1469 = vrot.lane.b32.xlu0 %v740, 80
        %v1470 = vpop.permute.xlu0 %1469
        %v1474 = vsel %vm743, %v1464, 0
        %v1477 = vsel %vm743, %v1466, 0
        %1479 = vmatprep.subr.mxu0 0.0
        %1480 = vmatpush1.msra.mxu0 0.0
        %1481 = vmatprep.subr.mxu0 0.0
        %1482 = vmatpush1.msra.mxu0 0.0
        %1483 = vmatprep.subr.mxu0 0.0
        %1484 = vmatpush1.msra.mxu0 0.0
        %1485 = vmatprep.subr.mxu0 0.0
        %1486 = vmatpush1.msra.mxu0 0.0
        %1487 = vmatprep.subr.mxu0 0.0
        %1488 = vmatpush1.msra.mxu0 0.0
        %1489 = vmatprep.subr.mxu0 0.0
        %1490 = vmatpush1.msra.mxu0 0.0
        %1491 = vmatprep.subr.mxu0 0.0
        %1492 = vmatpush1.msra.mxu0 0.0
        %1493 = vmatprep.subr.mxu0 0.0
        %1494 = vmatpush1.msra.mxu0 0.0
        %1495 = vmatprep.subr.mxu0 0.0
        %1496 = vmatpush1.msra.mxu0 0.0
        %1497 = vmatprep.subr.mxu0 0.0
        %1498 = vmatpush1.msra.mxu0 0.0
        %1499 = vmatprep.subr.mxu0 0.0
        %1500 = vmatpush1.msra.mxu0 0.0
        %1501 = vmatprep.subr.mxu0 0.0
        %1502 = vmatpush1.msra.mxu0 0.0
        %1503 = vmatprep.subr.mxu0 0.0
        %1504 = vmatpush1.msra.mxu0 0.0
        %1505 = vmatprep.subr.mxu0 0.0
        %1506 = vmatpush1.msra.mxu0 0.0
        %1507 = vmatprep.subr.mxu0 0.0
        %1508 = vmatpush1.msra.mxu0 %v1470
        %1509 = vmatprep.subr.mxu0 0.0
        %1510 = vmatpush1.msra.mxu0 %v1468
        %1511 = vmatprep.subr.mxu0 0.0
        %1512 = vmatpush2.msra.mxu0 0.0
        %1513 = vmatprep.subr.mxu0 0.0
        %1514 = vmatpush2.msra.mxu0 0.0
        %1515 = vmatprep.subr.mxu0 0.0
        %1516 = vmatpush2.msra.mxu0 0.0
        %1517 = vmatprep.subr.mxu0 0.0
        %1518 = vmatpush2.msra.mxu0 0.0
        %1519 = vmatprep.subr.mxu0 0.0
        %1520 = vmatpush2.msra.mxu0 0.0
        %1521 = vmatprep.subr.mxu0 0.0
        %1522 = vmatpush2.msra.mxu0 0.0
        %1523 = vmatprep.subr.mxu0 0.0
        %1524 = vmatpush2.msra.mxu0 0.0
        %1525 = vmatprep.subr.mxu0 0.0
        %1526 = vmatpush2.msra.mxu0 0.0
        %1527 = vmatprep.subr.mxu0 0.0
        %1528 = vmatpush2.msra.mxu0 0.0
        %1529 = vmatprep.subr.mxu0 0.0
        %1530 = vmatpush2.msra.mxu0 0.0
        %1531 = vmatprep.subr.mxu0 0.0
        %1532 = vmatpush2.msra.mxu0 0.0
        %1533 = vmatprep.subr.mxu0 0.0
        %1534 = vmatpush2.msra.mxu0 0.0
        %1535 = vmatprep.subr.mxu0 0.0
        %1536 = vmatpush2.msra.mxu0 0.0
        %1537 = vmatprep.subr.mxu0 0.0
        %1538 = vmatpush2.msra.mxu0 0.0
        %1539 = vmatprep.subr.mxu0 0.0
        %1540 = vmatpush2.msra.mxu0 0.0
        %1541 = vmatprep.subr.mxu0 0.0
        %1542 = vmatpush2.msra.mxu0 0.0
        %1543 = vmatprep.mubr.f32.mxu0 0.0
        %1544 = vmatmul.mubr.f32.gmra.mxu0 %v1474
        %v1545 = vpop.f32.mrf.mxu0
        %v1546 = vadd.f32 0.0, %v1545
        %v1547 = vpop.f32.mrf.mxu0
        %1548 = vmatprep.mubr.f32.mxu0 0.0
        %1549 = vmatmul.mubr.f32.gmra.mxu0 %v1477
        %v1550 = vpop.f32.mrf.mxu0
        %v1551 = vadd.f32 0.0, %v1550
        %v1552 = vpop.f32.mrf.mxu0
        %1553 = vdwg.mxu0
        %1554 = vrot.lane.b32.xlu0 %v553, 64
        %v1555 = vpop.permute.xlu0 %1554
        %1556 = vrot.lane.b32.xlu0 %v558, 64
        %v1557 = vpop.permute.xlu0 %1556
        %1558 = vrot.lane.b32.xlu0 %v644, 64
        %v1559 = vpop.permute.xlu0 %1558
        %1560 = vrot.lane.b32.xlu0 %v649, 64
        %v1561 = vpop.permute.xlu0 %1560
        %v1562 = vsel %vm743, %v1555, 0
        %v1564 = vsel %vm743, %v1557, 0
        %v1566 = vsel %vm743, %v1559, 0
        %v1568 = vsel %vm743, %v1561, 0
        %1570 = vmatprep.subr.mxu0 0.0
        %1571 = vmatpush1.xpose.msra.mxu0 0.0
        %1572 = vmatprep.subr.mxu0 0.0
        %1573 = vmatpush1.xpose.msra.mxu0 0.0
        %1574 = vmatprep.subr.mxu0 0.0
        %1575 = vmatpush1.xpose.msra.mxu0 0.0
        %1576 = vmatprep.subr.mxu0 0.0
        %1577 = vmatpush1.xpose.msra.mxu0 0.0
        %1578 = vmatprep.subr.mxu0 0.0
        %1579 = vmatpush1.xpose.msra.mxu0 0.0
        %1580 = vmatprep.subr.mxu0 0.0
        %1581 = vmatpush1.xpose.msra.mxu0 0.0
        %1582 = vmatprep.subr.mxu0 0.0
        %1583 = vmatpush1.xpose.msra.mxu0 0.0
        %1584 = vmatprep.subr.mxu0 0.0
        %1585 = vmatpush1.xpose.msra.mxu0 0.0
        %1586 = vmatprep.subr.mxu0 0.0
        %1587 = vmatpush1.xpose.msra.mxu0 0.0
        %1588 = vmatprep.subr.mxu0 0.0
        %1589 = vmatpush1.xpose.msra.mxu0 0.0
        %1590 = vmatprep.subr.mxu0 0.0
        %1591 = vmatpush1.xpose.msra.mxu0 0.0
        %1592 = vmatprep.subr.mxu0 0.0
        %1593 = vmatpush1.xpose.msra.mxu0 0.0
        %1594 = vmatprep.subr.mxu0 0.0
        %1595 = vmatpush1.xpose.msra.mxu0 0.0
        %1596 = vmatprep.subr.mxu0 0.0
        %1597 = vmatpush1.xpose.msra.mxu0 0.0
        %1598 = vmatprep.subr.mxu0 0.0
        %1599 = vmatpush1.xpose.msra.mxu0 %v1568
        %1600 = vmatprep.subr.mxu0 0.0
        %1601 = vmatpush1.xpose.msra.mxu0 %v1566
        %1602 = vmatprep.subr.mxu0 0.0
        %1603 = vmatpush2.xpose.msra.mxu0 0.0
        %1604 = vmatprep.subr.mxu0 0.0
        %1605 = vmatpush2.xpose.msra.mxu0 0.0
        %1606 = vmatprep.subr.mxu0 0.0
        %1607 = vmatpush2.xpose.msra.mxu0 0.0
        %1608 = vmatprep.subr.mxu0 0.0
        %1609 = vmatpush2.xpose.msra.mxu0 0.0
        %1610 = vmatprep.subr.mxu0 0.0
        %1611 = vmatpush2.xpose.msra.mxu0 0.0
        %1612 = vmatprep.subr.mxu0 0.0
        %1613 = vmatpush2.xpose.msra.mxu0 0.0
        %1614 = vmatprep.subr.mxu0 0.0
        %1615 = vmatpush2.xpose.msra.mxu0 0.0
        %1616 = vmatprep.subr.mxu0 0.0
        %1617 = vmatpush2.xpose.msra.mxu0 0.0
        %1618 = vmatprep.subr.mxu0 0.0
        %1619 = vmatpush2.xpose.msra.mxu0 0.0
        %1620 = vmatprep.subr.mxu0 0.0
        %1621 = vmatpush2.xpose.msra.mxu0 0.0
        %1622 = vmatprep.subr.mxu0 0.0
        %1623 = vmatpush2.xpose.msra.mxu0 0.0
        %1624 = vmatprep.subr.mxu0 0.0
        %1625 = vmatpush2.xpose.msra.mxu0 0.0
        %1626 = vmatprep.subr.mxu0 0.0
        %1627 = vmatpush2.xpose.msra.mxu0 0.0
        %1628 = vmatprep.subr.mxu0 0.0
        %1629 = vmatpush2.xpose.msra.mxu0 0.0
        %1630 = vmatprep.subr.mxu0 0.0
        %1631 = vmatpush2.xpose.msra.mxu0 0.0
        %1632 = vmatprep.subr.mxu0 0.0
        %1633 = vmatpush2.xpose.msra.mxu0 0.0
        %1634 = vmatprep.mubr.f32.mxu0 0.0
        %1635 = vmatmul.mubr.f32.gmra.mxu0 %v1562
        %v1636 = vpop.f32.mrf.mxu0
        %v1637 = vadd.f32 0.0, %v1636
        %v1638 = vpop.f32.mrf.mxu0
        %1639 = vmatprep.mubr.f32.mxu0 0.0
        %1640 = vmatmul.mubr.f32.gmra.mxu0 %v1564
        %v1641 = vpop.f32.mrf.mxu0
        %v1642 = vadd.f32 0.0, %v1641
        %v1643 = vpop.f32.mrf.mxu0
        %1644 = vdwg.mxu0
        %v1645 = vmul.f32 %v1637, 0.25
        %v1646 = vmul.f32 %v1642, 0.25
        %v1647 = vsel %vm833, -1e+09, %v1645
        %v1648 = vsel %vm834, -1e+09, %v1646
        %v1649 = vsel %vm743, %v1647, -inf
        %1650 = vmax.xlane.f32.xlu0 %v1649
        %v1651 = vpop.xlane.xlu0 %1650
        %v1652 = vsel %vm743, %v1648, -inf
        %1653 = vmax.xlane.f32.xlu0 %v1652
        %v1654 = vpop.xlane.xlu0 %1653
        %v1655 = vsub.f32 %v1647, %v1651
        %v1656 = vsub.f32 %v1648, %v1654
        %v1657 = vmul.f32 %v1655, 1.442695
        %v1658 = vpow.pop %v1657
        %v1659 = vmul.f32 %v1656, 1.442695
        %v1660 = vpow.pop %v1659
        %v1661 = vsel %vm743, %v1658, 0.0
        %1662 = vadd.xlane.f32.xlu0 %v1661
        %v1663 = vpop.xlane.xlu0 %1662
        %v1664 = vsel %vm743, %v1660, 0.0
        %1665 = vadd.xlane.f32.xlu0 %v1664
        %v1666 = vpop.xlane.xlu0 %1665
        %v1667 = vrcp.pop %v1663
        %v1668 = vmul.f32 %v1658, %v1667
        %v1669 = vrcp.pop %v1666
        %v1670 = vmul.f32 %v1660, %v1669
        %1671 = vrot.lane.b32.xlu0 %v735, 64
        %v1672 = vpop.permute.xlu0 %1671
        %1673 = vrot.lane.b32.xlu0 %v740, 64
        %v1674 = vpop.permute.xlu0 %1673
        %v1678 = vsel %vm743, %v1668, 0
        %v1681 = vsel %vm743, %v1670, 0
        %1683 = vmatprep.subr.mxu0 0.0
        %1684 = vmatpush1.msra.mxu0 0.0
        %1685 = vmatprep.subr.mxu0 0.0
        %1686 = vmatpush1.msra.mxu0 0.0
        %1687 = vmatprep.subr.mxu0 0.0
        %1688 = vmatpush1.msra.mxu0 0.0
        %1689 = vmatprep.subr.mxu0 0.0
        %1690 = vmatpush1.msra.mxu0 0.0
        %1691 = vmatprep.subr.mxu0 0.0
        %1692 = vmatpush1.msra.mxu0 0.0
        %1693 = vmatprep.subr.mxu0 0.0
        %1694 = vmatpush1.msra.mxu0 0.0
        %1695 = vmatprep.subr.mxu0 0.0
        %1696 = vmatpush1.msra.mxu0 0.0
        %1697 = vmatprep.subr.mxu0 0.0
        %1698 = vmatpush1.msra.mxu0 0.0
        %1699 = vmatprep.subr.mxu0 0.0
        %1700 = vmatpush1.msra.mxu0 0.0
        %1701 = vmatprep.subr.mxu0 0.0
        %1702 = vmatpush1.msra.mxu0 0.0
        %1703 = vmatprep.subr.mxu0 0.0
        %1704 = vmatpush1.msra.mxu0 0.0
        %1705 = vmatprep.subr.mxu0 0.0
        %1706 = vmatpush1.msra.mxu0 0.0
        %1707 = vmatprep.subr.mxu0 0.0
        %1708 = vmatpush1.msra.mxu0 0.0
        %1709 = vmatprep.subr.mxu0 0.0
        %1710 = vmatpush1.msra.mxu0 0.0
        %1711 = vmatprep.subr.mxu0 0.0
        %1712 = vmatpush1.msra.mxu0 %v1674
        %1713 = vmatprep.subr.mxu0 0.0
        %1714 = vmatpush1.msra.mxu0 %v1672
        %1715 = vmatprep.subr.mxu0 0.0
        %1716 = vmatpush2.msra.mxu0 0.0
        %1717 = vmatprep.subr.mxu0 0.0
        %1718 = vmatpush2.msra.mxu0 0.0
        %1719 = vmatprep.subr.mxu0 0.0
        %1720 = vmatpush2.msra.mxu0 0.0
        %1721 = vmatprep.subr.mxu0 0.0
        %1722 = vmatpush2.msra.mxu0 0.0
        %1723 = vmatprep.subr.mxu0 0.0
        %1724 = vmatpush2.msra.mxu0 0.0
        %1725 = vmatprep.subr.mxu0 0.0
        %1726 = vmatpush2.msra.mxu0 0.0
        %1727 = vmatprep.subr.mxu0 0.0
        %1728 = vmatpush2.msra.mxu0 0.0
        %1729 = vmatprep.subr.mxu0 0.0
        %1730 = vmatpush2.msra.mxu0 0.0
        %1731 = vmatprep.subr.mxu0 0.0
        %1732 = vmatpush2.msra.mxu0 0.0
        %1733 = vmatprep.subr.mxu0 0.0
        %1734 = vmatpush2.msra.mxu0 0.0
        %1735 = vmatprep.subr.mxu0 0.0
        %1736 = vmatpush2.msra.mxu0 0.0
        %1737 = vmatprep.subr.mxu0 0.0
        %1738 = vmatpush2.msra.mxu0 0.0
        %1739 = vmatprep.subr.mxu0 0.0
        %1740 = vmatpush2.msra.mxu0 0.0
        %1741 = vmatprep.subr.mxu0 0.0
        %1742 = vmatpush2.msra.mxu0 0.0
        %1743 = vmatprep.subr.mxu0 0.0
        %1744 = vmatpush2.msra.mxu0 0.0
        %1745 = vmatprep.subr.mxu0 0.0
        %1746 = vmatpush2.msra.mxu0 0.0
        %1747 = vmatprep.mubr.f32.mxu0 0.0
        %1748 = vmatmul.mubr.f32.gmra.mxu0 %v1678
        %v1749 = vpop.f32.mrf.mxu0
        %v1750 = vadd.f32 0.0, %v1749
        %v1751 = vpop.f32.mrf.mxu0
        %1752 = vmatprep.mubr.f32.mxu0 0.0
        %1753 = vmatmul.mubr.f32.gmra.mxu0 %v1681
        %v1754 = vpop.f32.mrf.mxu0
        %v1755 = vadd.f32 0.0, %v1754
        %v1756 = vpop.f32.mrf.mxu0
        %1757 = vdwg.mxu0
        %1758 = vrot.lane.b32.xlu0 %v553, 48
        %v1759 = vpop.permute.xlu0 %1758
        %1760 = vrot.lane.b32.xlu0 %v558, 48
        %v1761 = vpop.permute.xlu0 %1760
        %1762 = vrot.lane.b32.xlu0 %v644, 48
        %v1763 = vpop.permute.xlu0 %1762
        %1764 = vrot.lane.b32.xlu0 %v649, 48
        %v1765 = vpop.permute.xlu0 %1764
        %v1766 = vsel %vm743, %v1759, 0
        %v1768 = vsel %vm743, %v1761, 0
        %v1770 = vsel %vm743, %v1763, 0
        %v1772 = vsel %vm743, %v1765, 0
        %1774 = vmatprep.subr.mxu0 0.0
        %1775 = vmatpush1.xpose.msra.mxu0 0.0
        %1776 = vmatprep.subr.mxu0 0.0
        %1777 = vmatpush1.xpose.msra.mxu0 0.0
        %1778 = vmatprep.subr.mxu0 0.0
        %1779 = vmatpush1.xpose.msra.mxu0 0.0
        %1780 = vmatprep.subr.mxu0 0.0
        %1781 = vmatpush1.xpose.msra.mxu0 0.0
        %1782 = vmatprep.subr.mxu0 0.0
        %1783 = vmatpush1.xpose.msra.mxu0 0.0
        %1784 = vmatprep.subr.mxu0 0.0
        %1785 = vmatpush1.xpose.msra.mxu0 0.0
        %1786 = vmatprep.subr.mxu0 0.0
        %1787 = vmatpush1.xpose.msra.mxu0 0.0
        %1788 = vmatprep.subr.mxu0 0.0
        %1789 = vmatpush1.xpose.msra.mxu0 0.0
        %1790 = vmatprep.subr.mxu0 0.0
        %1791 = vmatpush1.xpose.msra.mxu0 0.0
        %1792 = vmatprep.subr.mxu0 0.0
        %1793 = vmatpush1.xpose.msra.mxu0 0.0
        %1794 = vmatprep.subr.mxu0 0.0
        %1795 = vmatpush1.xpose.msra.mxu0 0.0
        %1796 = vmatprep.subr.mxu0 0.0
        %1797 = vmatpush1.xpose.msra.mxu0 0.0
        %1798 = vmatprep.subr.mxu0 0.0
        %1799 = vmatpush1.xpose.msra.mxu0 0.0
        %1800 = vmatprep.subr.mxu0 0.0
        %1801 = vmatpush1.xpose.msra.mxu0 0.0
        %1802 = vmatprep.subr.mxu0 0.0
        %1803 = vmatpush1.xpose.msra.mxu0 %v1772
        %1804 = vmatprep.subr.mxu0 0.0
        %1805 = vmatpush1.xpose.msra.mxu0 %v1770
        %1806 = vmatprep.subr.mxu0 0.0
        %1807 = vmatpush2.xpose.msra.mxu0 0.0
        %1808 = vmatprep.subr.mxu0 0.0
        %1809 = vmatpush2.xpose.msra.mxu0 0.0
        %1810 = vmatprep.subr.mxu0 0.0
        %1811 = vmatpush2.xpose.msra.mxu0 0.0
        %1812 = vmatprep.subr.mxu0 0.0
        %1813 = vmatpush2.xpose.msra.mxu0 0.0
        %1814 = vmatprep.subr.mxu0 0.0
        %1815 = vmatpush2.xpose.msra.mxu0 0.0
        %1816 = vmatprep.subr.mxu0 0.0
        %1817 = vmatpush2.xpose.msra.mxu0 0.0
        %1818 = vmatprep.subr.mxu0 0.0
        %1819 = vmatpush2.xpose.msra.mxu0 0.0
        %1820 = vmatprep.subr.mxu0 0.0
        %1821 = vmatpush2.xpose.msra.mxu0 0.0
        %1822 = vmatprep.subr.mxu0 0.0
        %1823 = vmatpush2.xpose.msra.mxu0 0.0
        %1824 = vmatprep.subr.mxu0 0.0
        %1825 = vmatpush2.xpose.msra.mxu0 0.0
        %1826 = vmatprep.subr.mxu0 0.0
        %1827 = vmatpush2.xpose.msra.mxu0 0.0
        %1828 = vmatprep.subr.mxu0 0.0
        %1829 = vmatpush2.xpose.msra.mxu0 0.0
        %1830 = vmatprep.subr.mxu0 0.0
        %1831 = vmatpush2.xpose.msra.mxu0 0.0
        %1832 = vmatprep.subr.mxu0 0.0
        %1833 = vmatpush2.xpose.msra.mxu0 0.0
        %1834 = vmatprep.subr.mxu0 0.0
        %1835 = vmatpush2.xpose.msra.mxu0 0.0
        %1836 = vmatprep.subr.mxu0 0.0
        %1837 = vmatpush2.xpose.msra.mxu0 0.0
        %1838 = vmatprep.mubr.f32.mxu0 0.0
        %1839 = vmatmul.mubr.f32.gmra.mxu0 %v1766
        %v1840 = vpop.f32.mrf.mxu0
        %v1841 = vadd.f32 0.0, %v1840
        %v1842 = vpop.f32.mrf.mxu0
        %1843 = vmatprep.mubr.f32.mxu0 0.0
        %1844 = vmatmul.mubr.f32.gmra.mxu0 %v1768
        %v1845 = vpop.f32.mrf.mxu0
        %v1846 = vadd.f32 0.0, %v1845
        %v1847 = vpop.f32.mrf.mxu0
        %1848 = vdwg.mxu0
        %v1849 = vmul.f32 %v1841, 0.25
        %v1850 = vmul.f32 %v1846, 0.25
        %v1851 = vsel %vm833, -1e+09, %v1849
        %v1852 = vsel %vm834, -1e+09, %v1850
        %v1853 = vsel %vm743, %v1851, -inf
        %1854 = vmax.xlane.f32.xlu0 %v1853
        %v1855 = vpop.xlane.xlu0 %1854
        %v1856 = vsel %vm743, %v1852, -inf
        %1857 = vmax.xlane.f32.xlu0 %v1856
        %v1858 = vpop.xlane.xlu0 %1857
        %v1859 = vsub.f32 %v1851, %v1855
        %v1860 = vsub.f32 %v1852, %v1858
        %v1861 = vmul.f32 %v1859, 1.442695
        %v1862 = vpow.pop %v1861
        %v1863 = vmul.f32 %v1860, 1.442695
        %v1864 = vpow.pop %v1863
        %v1865 = vsel %vm743, %v1862, 0.0
        %1866 = vadd.xlane.f32.xlu0 %v1865
        %v1867 = vpop.xlane.xlu0 %1866
        %v1868 = vsel %vm743, %v1864, 0.0
        %1869 = vadd.xlane.f32.xlu0 %v1868
        %v1870 = vpop.xlane.xlu0 %1869
        %v1871 = vrcp.pop %v1867
        %v1872 = vmul.f32 %v1862, %v1871
        %v1873 = vrcp.pop %v1870
        %v1874 = vmul.f32 %v1864, %v1873
        %1875 = vrot.lane.b32.xlu0 %v735, 48
        %v1876 = vpop.permute.xlu0 %1875
        %1877 = vrot.lane.b32.xlu0 %v740, 48
        %v1878 = vpop.permute.xlu0 %1877
        %v1882 = vsel %vm743, %v1872, 0
        %v1885 = vsel %vm743, %v1874, 0
        %1887 = vmatprep.subr.mxu0 0.0
        %1888 = vmatpush1.msra.mxu0 0.0
        %1889 = vmatprep.subr.mxu0 0.0
        %1890 = vmatpush1.msra.mxu0 0.0
        %1891 = vmatprep.subr.mxu0 0.0
        %1892 = vmatpush1.msra.mxu0 0.0
        %1893 = vmatprep.subr.mxu0 0.0
        %1894 = vmatpush1.msra.mxu0 0.0
        %1895 = vmatprep.subr.mxu0 0.0
        %1896 = vmatpush1.msra.mxu0 0.0
        %1897 = vmatprep.subr.mxu0 0.0
        %1898 = vmatpush1.msra.mxu0 0.0
        %1899 = vmatprep.subr.mxu0 0.0
        %1900 = vmatpush1.msra.mxu0 0.0
        %1901 = vmatprep.subr.mxu0 0.0
        %1902 = vmatpush1.msra.mxu0 0.0
        %1903 = vmatprep.subr.mxu0 0.0
        %1904 = vmatpush1.msra.mxu0 0.0
        %1905 = vmatprep.subr.mxu0 0.0
        %1906 = vmatpush1.msra.mxu0 0.0
        %1907 = vmatprep.subr.mxu0 0.0
        %1908 = vmatpush1.msra.mxu0 0.0
        %1909 = vmatprep.subr.mxu0 0.0
        %1910 = vmatpush1.msra.mxu0 0.0
        %1911 = vmatprep.subr.mxu0 0.0
        %1912 = vmatpush1.msra.mxu0 0.0
        %1913 = vmatprep.subr.mxu0 0.0
        %1914 = vmatpush1.msra.mxu0 0.0
        %1915 = vmatprep.subr.mxu0 0.0
        %1916 = vmatpush1.msra.mxu0 %v1878
        %1917 = vmatprep.subr.mxu0 0.0
        %1918 = vmatpush1.msra.mxu0 %v1876
        %1919 = vmatprep.subr.mxu0 0.0
        %1920 = vmatpush2.msra.mxu0 0.0
        %1921 = vmatprep.subr.mxu0 0.0
        %1922 = vmatpush2.msra.mxu0 0.0
        %1923 = vmatprep.subr.mxu0 0.0
        %1924 = vmatpush2.msra.mxu0 0.0
        %1925 = vmatprep.subr.mxu0 0.0
        %1926 = vmatpush2.msra.mxu0 0.0
        %1927 = vmatprep.subr.mxu0 0.0
        %1928 = vmatpush2.msra.mxu0 0.0
        %1929 = vmatprep.subr.mxu0 0.0
        %1930 = vmatpush2.msra.mxu0 0.0
        %1931 = vmatprep.subr.mxu0 0.0
        %1932 = vmatpush2.msra.mxu0 0.0
        %1933 = vmatprep.subr.mxu0 0.0
        %1934 = vmatpush2.msra.mxu0 0.0
        %1935 = vmatprep.subr.mxu0 0.0
        %1936 = vmatpush2.msra.mxu0 0.0
        %1937 = vmatprep.subr.mxu0 0.0
        %1938 = vmatpush2.msra.mxu0 0.0
        %1939 = vmatprep.subr.mxu0 0.0
        %1940 = vmatpush2.msra.mxu0 0.0
        %1941 = vmatprep.subr.mxu0 0.0
        %1942 = vmatpush2.msra.mxu0 0.0
        %1943 = vmatprep.subr.mxu0 0.0
        %1944 = vmatpush2.msra.mxu0 0.0
        %1945 = vmatprep.subr.mxu0 0.0
        %1946 = vmatpush2.msra.mxu0 0.0
        %1947 = vmatprep.subr.mxu0 0.0
        %1948 = vmatpush2.msra.mxu0 0.0
        %1949 = vmatprep.subr.mxu0 0.0
        %1950 = vmatpush2.msra.mxu0 0.0
        %1951 = vmatprep.mubr.f32.mxu0 0.0
        %1952 = vmatmul.mubr.f32.gmra.mxu0 %v1882
        %v1953 = vpop.f32.mrf.mxu0
        %v1954 = vadd.f32 0.0, %v1953
        %v1955 = vpop.f32.mrf.mxu0
        %1956 = vmatprep.mubr.f32.mxu0 0.0
        %1957 = vmatmul.mubr.f32.gmra.mxu0 %v1885
        %v1958 = vpop.f32.mrf.mxu0
        %v1959 = vadd.f32 0.0, %v1958
        %v1960 = vpop.f32.mrf.mxu0
        %1961 = vdwg.mxu0
        %1962 = vrot.lane.b32.xlu0 %v553, 32
        %v1963 = vpop.permute.xlu0 %1962
        %1964 = vrot.lane.b32.xlu0 %v558, 32
        %v1965 = vpop.permute.xlu0 %1964
        %1966 = vrot.lane.b32.xlu0 %v644, 32
        %v1967 = vpop.permute.xlu0 %1966
        %1968 = vrot.lane.b32.xlu0 %v649, 32
        %v1969 = vpop.permute.xlu0 %1968
        %v1970 = vsel %vm743, %v1963, 0
        %v1972 = vsel %vm743, %v1965, 0
        %v1974 = vsel %vm743, %v1967, 0
        %v1976 = vsel %vm743, %v1969, 0
        %1978 = vmatprep.subr.mxu0 0.0
        %1979 = vmatpush1.xpose.msra.mxu0 0.0
        %1980 = vmatprep.subr.mxu0 0.0
        %1981 = vmatpush1.xpose.msra.mxu0 0.0
        %1982 = vmatprep.subr.mxu0 0.0
        %1983 = vmatpush1.xpose.msra.mxu0 0.0
        %1984 = vmatprep.subr.mxu0 0.0
        %1985 = vmatpush1.xpose.msra.mxu0 0.0
        %1986 = vmatprep.subr.mxu0 0.0
        %1987 = vmatpush1.xpose.msra.mxu0 0.0
        %1988 = vmatprep.subr.mxu0 0.0
        %1989 = vmatpush1.xpose.msra.mxu0 0.0
        %1990 = vmatprep.subr.mxu0 0.0
        %1991 = vmatpush1.xpose.msra.mxu0 0.0
        %1992 = vmatprep.subr.mxu0 0.0
        %1993 = vmatpush1.xpose.msra.mxu0 0.0
        %1994 = vmatprep.subr.mxu0 0.0
        %1995 = vmatpush1.xpose.msra.mxu0 0.0
        %1996 = vmatprep.subr.mxu0 0.0
        %1997 = vmatpush1.xpose.msra.mxu0 0.0
        %1998 = vmatprep.subr.mxu0 0.0
        %1999 = vmatpush1.xpose.msra.mxu0 0.0
        %2000 = vmatprep.subr.mxu0 0.0
        %2001 = vmatpush1.xpose.msra.mxu0 0.0
        %2002 = vmatprep.subr.mxu0 0.0
        %2003 = vmatpush1.xpose.msra.mxu0 0.0
        %2004 = vmatprep.subr.mxu0 0.0
        %2005 = vmatpush1.xpose.msra.mxu0 0.0
        %2006 = vmatprep.subr.mxu0 0.0
        %2007 = vmatpush1.xpose.msra.mxu0 %v1976
        %2008 = vmatprep.subr.mxu0 0.0
        %2009 = vmatpush1.xpose.msra.mxu0 %v1974
        %2010 = vmatprep.subr.mxu0 0.0
        %2011 = vmatpush2.xpose.msra.mxu0 0.0
        %2012 = vmatprep.subr.mxu0 0.0
        %2013 = vmatpush2.xpose.msra.mxu0 0.0
        %2014 = vmatprep.subr.mxu0 0.0
        %2015 = vmatpush2.xpose.msra.mxu0 0.0
        %2016 = vmatprep.subr.mxu0 0.0
        %2017 = vmatpush2.xpose.msra.mxu0 0.0
        %2018 = vmatprep.subr.mxu0 0.0
        %2019 = vmatpush2.xpose.msra.mxu0 0.0
        %2020 = vmatprep.subr.mxu0 0.0
        %2021 = vmatpush2.xpose.msra.mxu0 0.0
        %2022 = vmatprep.subr.mxu0 0.0
        %2023 = vmatpush2.xpose.msra.mxu0 0.0
        %2024 = vmatprep.subr.mxu0 0.0
        %2025 = vmatpush2.xpose.msra.mxu0 0.0
        %2026 = vmatprep.subr.mxu0 0.0
        %2027 = vmatpush2.xpose.msra.mxu0 0.0
        %2028 = vmatprep.subr.mxu0 0.0
        %2029 = vmatpush2.xpose.msra.mxu0 0.0
        %2030 = vmatprep.subr.mxu0 0.0
        %2031 = vmatpush2.xpose.msra.mxu0 0.0
        %2032 = vmatprep.subr.mxu0 0.0
        %2033 = vmatpush2.xpose.msra.mxu0 0.0
        %2034 = vmatprep.subr.mxu0 0.0
        %2035 = vmatpush2.xpose.msra.mxu0 0.0
        %2036 = vmatprep.subr.mxu0 0.0
        %2037 = vmatpush2.xpose.msra.mxu0 0.0
        %2038 = vmatprep.subr.mxu0 0.0
        %2039 = vmatpush2.xpose.msra.mxu0 0.0
        %2040 = vmatprep.subr.mxu0 0.0
        %2041 = vmatpush2.xpose.msra.mxu0 0.0
        %2042 = vmatprep.mubr.f32.mxu0 0.0
        %2043 = vmatmul.mubr.f32.gmra.mxu0 %v1970
        %v2044 = vpop.f32.mrf.mxu0
        %v2045 = vadd.f32 0.0, %v2044
        %v2046 = vpop.f32.mrf.mxu0
        %2047 = vmatprep.mubr.f32.mxu0 0.0
        %2048 = vmatmul.mubr.f32.gmra.mxu0 %v1972
        %v2049 = vpop.f32.mrf.mxu0
        %v2050 = vadd.f32 0.0, %v2049
        %v2051 = vpop.f32.mrf.mxu0
        %2052 = vdwg.mxu0
        %v2053 = vmul.f32 %v2045, 0.25
        %v2054 = vmul.f32 %v2050, 0.25
        %v2055 = vsel %vm833, -1e+09, %v2053
        %v2056 = vsel %vm834, -1e+09, %v2054
        %v2057 = vsel %vm743, %v2055, -inf
        %2058 = vmax.xlane.f32.xlu0 %v2057
        %v2059 = vpop.xlane.xlu0 %2058
        %v2060 = vsel %vm743, %v2056, -inf
        %2061 = vmax.xlane.f32.xlu0 %v2060
        %v2062 = vpop.xlane.xlu0 %2061
        %v2063 = vsub.f32 %v2055, %v2059
        %v2064 = vsub.f32 %v2056, %v2062
        %v2065 = vmul.f32 %v2063, 1.442695
        %v2066 = vpow.pop %v2065
        %v2067 = vmul.f32 %v2064, 1.442695
        %v2068 = vpow.pop %v2067
        %v2069 = vsel %vm743, %v2066, 0.0
        %2070 = vadd.xlane.f32.xlu0 %v2069
        %v2071 = vpop.xlane.xlu0 %2070
        %v2072 = vsel %vm743, %v2068, 0.0
        %2073 = vadd.xlane.f32.xlu0 %v2072
        %v2074 = vpop.xlane.xlu0 %2073
        %v2075 = vrcp.pop %v2071
        %v2076 = vmul.f32 %v2066, %v2075
        %v2077 = vrcp.pop %v2074
        %v2078 = vmul.f32 %v2068, %v2077
        %2079 = vrot.lane.b32.xlu0 %v735, 32
        %v2080 = vpop.permute.xlu0 %2079
        %2081 = vrot.lane.b32.xlu0 %v740, 32
        %v2082 = vpop.permute.xlu0 %2081
        %v2086 = vsel %vm743, %v2076, 0
        %v2089 = vsel %vm743, %v2078, 0
        %2091 = vmatprep.subr.mxu0 0.0
        %2092 = vmatpush1.msra.mxu0 0.0
        %2093 = vmatprep.subr.mxu0 0.0
        %2094 = vmatpush1.msra.mxu0 0.0
        %2095 = vmatprep.subr.mxu0 0.0
        %2096 = vmatpush1.msra.mxu0 0.0
        %2097 = vmatprep.subr.mxu0 0.0
        %2098 = vmatpush1.msra.mxu0 0.0
        %2099 = vmatprep.subr.mxu0 0.0
        %2100 = vmatpush1.msra.mxu0 0.0
        %2101 = vmatprep.subr.mxu0 0.0
        %2102 = vmatpush1.msra.mxu0 0.0
        %2103 = vmatprep.subr.mxu0 0.0
        %2104 = vmatpush1.msra.mxu0 0.0
        %2105 = vmatprep.subr.mxu0 0.0
        %2106 = vmatpush1.msra.mxu0 0.0
        %2107 = vmatprep.subr.mxu0 0.0
        %2108 = vmatpush1.msra.mxu0 0.0
        %2109 = vmatprep.subr.mxu0 0.0
        %2110 = vmatpush1.msra.mxu0 0.0
        %2111 = vmatprep.subr.mxu0 0.0
        %2112 = vmatpush1.msra.mxu0 0.0
        %2113 = vmatprep.subr.mxu0 0.0
        %2114 = vmatpush1.msra.mxu0 0.0
        %2115 = vmatprep.subr.mxu0 0.0
        %2116 = vmatpush1.msra.mxu0 0.0
        %2117 = vmatprep.subr.mxu0 0.0
        %2118 = vmatpush1.msra.mxu0 0.0
        %2119 = vmatprep.subr.mxu0 0.0
        %2120 = vmatpush1.msra.mxu0 %v2082
        %2121 = vmatprep.subr.mxu0 0.0
        %2122 = vmatpush1.msra.mxu0 %v2080
        %2123 = vmatprep.subr.mxu0 0.0
        %2124 = vmatpush2.msra.mxu0 0.0
        %2125 = vmatprep.subr.mxu0 0.0
        %2126 = vmatpush2.msra.mxu0 0.0
        %2127 = vmatprep.subr.mxu0 0.0
        %2128 = vmatpush2.msra.mxu0 0.0
        %2129 = vmatprep.subr.mxu0 0.0
        %2130 = vmatpush2.msra.mxu0 0.0
        %2131 = vmatprep.subr.mxu0 0.0
        %2132 = vmatpush2.msra.mxu0 0.0
        %2133 = vmatprep.subr.mxu0 0.0
        %2134 = vmatpush2.msra.mxu0 0.0
        %2135 = vmatprep.subr.mxu0 0.0
        %2136 = vmatpush2.msra.mxu0 0.0
        %2137 = vmatprep.subr.mxu0 0.0
        %2138 = vmatpush2.msra.mxu0 0.0
        %2139 = vmatprep.subr.mxu0 0.0
        %2140 = vmatpush2.msra.mxu0 0.0
        %2141 = vmatprep.subr.mxu0 0.0
        %2142 = vmatpush2.msra.mxu0 0.0
        %2143 = vmatprep.subr.mxu0 0.0
        %2144 = vmatpush2.msra.mxu0 0.0
        %2145 = vmatprep.subr.mxu0 0.0
        %2146 = vmatpush2.msra.mxu0 0.0
        %2147 = vmatprep.subr.mxu0 0.0
        %2148 = vmatpush2.msra.mxu0 0.0
        %2149 = vmatprep.subr.mxu0 0.0
        %2150 = vmatpush2.msra.mxu0 0.0
        %2151 = vmatprep.subr.mxu0 0.0
        %2152 = vmatpush2.msra.mxu0 0.0
        %2153 = vmatprep.subr.mxu0 0.0
        %2154 = vmatpush2.msra.mxu0 0.0
        %2155 = vmatprep.mubr.f32.mxu0 0.0
        %2156 = vmatmul.mubr.f32.gmra.mxu0 %v2086
        %v2157 = vpop.f32.mrf.mxu0
        %v2158 = vadd.f32 0.0, %v2157
        %v2159 = vpop.f32.mrf.mxu0
        %2160 = vmatprep.mubr.f32.mxu0 0.0
        %2161 = vmatmul.mubr.f32.gmra.mxu0 %v2089
        %v2162 = vpop.f32.mrf.mxu0
        %v2163 = vadd.f32 0.0, %v2162
        %v2164 = vpop.f32.mrf.mxu0
        %2165 = vdwg.mxu0
        %2166 = vrot.lane.b32.xlu0 %v553, 16
        %v2167 = vpop.permute.xlu0 %2166
        %2168 = vrot.lane.b32.xlu0 %v558, 16
        %v2169 = vpop.permute.xlu0 %2168
        %2170 = vrot.lane.b32.xlu0 %v644, 16
        %v2171 = vpop.permute.xlu0 %2170
        %2172 = vrot.lane.b32.xlu0 %v649, 16
        %v2173 = vpop.permute.xlu0 %2172
        %v2174 = vsel %vm743, %v2167, 0
        %v2176 = vsel %vm743, %v2169, 0
        %v2178 = vsel %vm743, %v2171, 0
        %v2180 = vsel %vm743, %v2173, 0
        %2182 = vmatprep.subr.mxu0 0.0
        %2183 = vmatpush1.xpose.msra.mxu0 0.0
        %2184 = vmatprep.subr.mxu0 0.0
        %2185 = vmatpush1.xpose.msra.mxu0 0.0
        %2186 = vmatprep.subr.mxu0 0.0
        %2187 = vmatpush1.xpose.msra.mxu0 0.0
        %2188 = vmatprep.subr.mxu0 0.0
        %2189 = vmatpush1.xpose.msra.mxu0 0.0
        %2190 = vmatprep.subr.mxu0 0.0
        %2191 = vmatpush1.xpose.msra.mxu0 0.0
        %2192 = vmatprep.subr.mxu0 0.0
        %2193 = vmatpush1.xpose.msra.mxu0 0.0
        %2194 = vmatprep.subr.mxu0 0.0
        %2195 = vmatpush1.xpose.msra.mxu0 0.0
        %2196 = vmatprep.subr.mxu0 0.0
        %2197 = vmatpush1.xpose.msra.mxu0 0.0
        %2198 = vmatprep.subr.mxu0 0.0
        %2199 = vmatpush1.xpose.msra.mxu0 0.0
        %2200 = vmatprep.subr.mxu0 0.0
        %2201 = vmatpush1.xpose.msra.mxu0 0.0
        %2202 = vmatprep.subr.mxu0 0.0
        %2203 = vmatpush1.xpose.msra.mxu0 0.0
        %2204 = vmatprep.subr.mxu0 0.0
        %2205 = vmatpush1.xpose.msra.mxu0 0.0
        %2206 = vmatprep.subr.mxu0 0.0
        %2207 = vmatpush1.xpose.msra.mxu0 0.0
        %2208 = vmatprep.subr.mxu0 0.0
        %2209 = vmatpush1.xpose.msra.mxu0 0.0
        %2210 = vmatprep.subr.mxu0 0.0
        %2211 = vmatpush1.xpose.msra.mxu0 %v2180
        %2212 = vmatprep.subr.mxu0 0.0
        %2213 = vmatpush1.xpose.msra.mxu0 %v2178
        %2214 = vmatprep.subr.mxu0 0.0
        %2215 = vmatpush2.xpose.msra.mxu0 0.0
        %2216 = vmatprep.subr.mxu0 0.0
        %2217 = vmatpush2.xpose.msra.mxu0 0.0
        %2218 = vmatprep.subr.mxu0 0.0
        %2219 = vmatpush2.xpose.msra.mxu0 0.0
        %2220 = vmatprep.subr.mxu0 0.0
        %2221 = vmatpush2.xpose.msra.mxu0 0.0
        %2222 = vmatprep.subr.mxu0 0.0
        %2223 = vmatpush2.xpose.msra.mxu0 0.0
        %2224 = vmatprep.subr.mxu0 0.0
        %2225 = vmatpush2.xpose.msra.mxu0 0.0
        %2226 = vmatprep.subr.mxu0 0.0
        %2227 = vmatpush2.xpose.msra.mxu0 0.0
        %2228 = vmatprep.subr.mxu0 0.0
        %2229 = vmatpush2.xpose.msra.mxu0 0.0
        %2230 = vmatprep.subr.mxu0 0.0
        %2231 = vmatpush2.xpose.msra.mxu0 0.0
        %2232 = vmatprep.subr.mxu0 0.0
        %2233 = vmatpush2.xpose.msra.mxu0 0.0
        %2234 = vmatprep.subr.mxu0 0.0
        %2235 = vmatpush2.xpose.msra.mxu0 0.0
        %2236 = vmatprep.subr.mxu0 0.0
        %2237 = vmatpush2.xpose.msra.mxu0 0.0
        %2238 = vmatprep.subr.mxu0 0.0
        %2239 = vmatpush2.xpose.msra.mxu0 0.0
        %2240 = vmatprep.subr.mxu0 0.0
        %2241 = vmatpush2.xpose.msra.mxu0 0.0
        %2242 = vmatprep.subr.mxu0 0.0
        %2243 = vmatpush2.xpose.msra.mxu0 0.0
        %2244 = vmatprep.subr.mxu0 0.0
        %2245 = vmatpush2.xpose.msra.mxu0 0.0
        %2246 = vmatprep.mubr.f32.mxu0 0.0
        %2247 = vmatmul.mubr.f32.gmra.mxu0 %v2174
        %v2248 = vpop.f32.mrf.mxu0
        %v2249 = vadd.f32 0.0, %v2248
        %v2250 = vpop.f32.mrf.mxu0
        %2251 = vmatprep.mubr.f32.mxu0 0.0
        %2252 = vmatmul.mubr.f32.gmra.mxu0 %v2176
        %v2253 = vpop.f32.mrf.mxu0
        %v2254 = vadd.f32 0.0, %v2253
        %v2255 = vpop.f32.mrf.mxu0
        %2256 = vdwg.mxu0
        %v2257 = vmul.f32 %v2249, 0.25
        %v2258 = vmul.f32 %v2254, 0.25
        %v2259 = vsel %vm833, -1e+09, %v2257
        %v2260 = vsel %vm834, -1e+09, %v2258
        %v2261 = vsel %vm743, %v2259, -inf
        %2262 = vmax.xlane.f32.xlu0 %v2261
        %v2263 = vpop.xlane.xlu0 %2262
        %v2264 = vsel %vm743, %v2260, -inf
        %2265 = vmax.xlane.f32.xlu0 %v2264
        %v2266 = vpop.xlane.xlu0 %2265
        %v2267 = vsub.f32 %v2259, %v2263
        %v2268 = vsub.f32 %v2260, %v2266
        %v2269 = vmul.f32 %v2267, 1.442695
        %v2270 = vpow.pop %v2269
        %v2271 = vmul.f32 %v2268, 1.442695
        %v2272 = vpow.pop %v2271
        %v2273 = vsel %vm743, %v2270, 0.0
        %2274 = vadd.xlane.f32.xlu0 %v2273
        %v2275 = vpop.xlane.xlu0 %2274
        %v2276 = vsel %vm743, %v2272, 0.0
        %2277 = vadd.xlane.f32.xlu0 %v2276
        %v2278 = vpop.xlane.xlu0 %2277
        %v2279 = vrcp.pop %v2275
        %v2280 = vmul.f32 %v2270, %v2279
        %v2281 = vrcp.pop %v2278
        %v2282 = vmul.f32 %v2272, %v2281
        %2283 = vrot.lane.b32.xlu0 %v735, 16
        %v2284 = vpop.permute.xlu0 %2283
        %2285 = vrot.lane.b32.xlu0 %v740, 16
        %v2286 = vpop.permute.xlu0 %2285
        %v2290 = vsel %vm743, %v2280, 0
        %v2293 = vsel %vm743, %v2282, 0
        %2295 = vmatprep.subr.mxu0 0.0
        %2296 = vmatpush1.msra.mxu0 0.0
        %2297 = vmatprep.subr.mxu0 0.0
        %2298 = vmatpush1.msra.mxu0 0.0
        %2299 = vmatprep.subr.mxu0 0.0
        %2300 = vmatpush1.msra.mxu0 0.0
        %2301 = vmatprep.subr.mxu0 0.0
        %2302 = vmatpush1.msra.mxu0 0.0
        %2303 = vmatprep.subr.mxu0 0.0
        %2304 = vmatpush1.msra.mxu0 0.0
        %2305 = vmatprep.subr.mxu0 0.0
        %2306 = vmatpush1.msra.mxu0 0.0
        %2307 = vmatprep.subr.mxu0 0.0
        %2308 = vmatpush1.msra.mxu0 0.0
        %2309 = vmatprep.subr.mxu0 0.0
        %2310 = vmatpush1.msra.mxu0 0.0
        %2311 = vmatprep.subr.mxu0 0.0
        %2312 = vmatpush1.msra.mxu0 0.0
        %2313 = vmatprep.subr.mxu0 0.0
        %2314 = vmatpush1.msra.mxu0 0.0
        %2315 = vmatprep.subr.mxu0 0.0
        %2316 = vmatpush1.msra.mxu0 0.0
        %2317 = vmatprep.subr.mxu0 0.0
        %2318 = vmatpush1.msra.mxu0 0.0
        %2319 = vmatprep.subr.mxu0 0.0
        %2320 = vmatpush1.msra.mxu0 0.0
        %2321 = vmatprep.subr.mxu0 0.0
        %2322 = vmatpush1.msra.mxu0 0.0
        %2323 = vmatprep.subr.mxu0 0.0
        %2324 = vmatpush1.msra.mxu0 %v2286
        %2325 = vmatprep.subr.mxu0 0.0
        %2326 = vmatpush1.msra.mxu0 %v2284
        %2327 = vmatprep.subr.mxu0 0.0
        %2328 = vmatpush2.msra.mxu0 0.0
        %2329 = vmatprep.subr.mxu0 0.0
        %2330 = vmatpush2.msra.mxu0 0.0
        %2331 = vmatprep.subr.mxu0 0.0
        %2332 = vmatpush2.msra.mxu0 0.0
        %2333 = vmatprep.subr.mxu0 0.0
        %2334 = vmatpush2.msra.mxu0 0.0
        %2335 = vmatprep.subr.mxu0 0.0
        %2336 = vmatpush2.msra.mxu0 0.0
        %2337 = vmatprep.subr.mxu0 0.0
        %2338 = vmatpush2.msra.mxu0 0.0
        %2339 = vmatprep.subr.mxu0 0.0
        %2340 = vmatpush2.msra.mxu0 0.0
        %2341 = vmatprep.subr.mxu0 0.0
        %2342 = vmatpush2.msra.mxu0 0.0
        %2343 = vmatprep.subr.mxu0 0.0
        %2344 = vmatpush2.msra.mxu0 0.0
        %2345 = vmatprep.subr.mxu0 0.0
        %2346 = vmatpush2.msra.mxu0 0.0
        %2347 = vmatprep.subr.mxu0 0.0
        %2348 = vmatpush2.msra.mxu0 0.0
        %2349 = vmatprep.subr.mxu0 0.0
        %2350 = vmatpush2.msra.mxu0 0.0
        %2351 = vmatprep.subr.mxu0 0.0
        %2352 = vmatpush2.msra.mxu0 0.0
        %2353 = vmatprep.subr.mxu0 0.0
        %2354 = vmatpush2.msra.mxu0 0.0
        %2355 = vmatprep.subr.mxu0 0.0
        %2356 = vmatpush2.msra.mxu0 0.0
        %2357 = vmatprep.subr.mxu0 0.0
        %2358 = vmatpush2.msra.mxu0 0.0
        %2359 = vmatprep.mubr.f32.mxu0 0.0
        %2360 = vmatmul.mubr.f32.gmra.mxu0 %v2290
        %v2361 = vpop.f32.mrf.mxu0
        %v2362 = vadd.f32 0.0, %v2361
        %v2363 = vpop.f32.mrf.mxu0
        %2364 = vmatprep.mubr.f32.mxu0 0.0
        %2365 = vmatmul.mubr.f32.gmra.mxu0 %v2293
        %v2366 = vpop.f32.mrf.mxu0
        %v2367 = vadd.f32 0.0, %v2366
        %v2368 = vpop.f32.mrf.mxu0
        %2369 = vdwg.mxu0
        %2372 = vrot.lane.b32.xlu0 %v1138, 16
        %v2373 = vpop.permute.xlu0 %2372
        %2374 = vrot.lane.b32.xlu0 %v1143, 16
        %v2375 = vpop.permute.xlu0 %2374
        %2380 = vrot.lane.b32.xlu0 %v1342, 32
        %v2381 = vpop.permute.xlu0 %2380
        %2382 = vrot.lane.b32.xlu0 %v1347, 32
        %v2383 = vpop.permute.xlu0 %2382
        %2388 = vrot.lane.b32.xlu0 %v1546, 48
        %v2389 = vpop.permute.xlu0 %2388
        %2390 = vrot.lane.b32.xlu0 %v1551, 48
        %v2391 = vpop.permute.xlu0 %2390
        %2396 = vrot.lane.b32.xlu0 %v1750, 64
        %v2397 = vpop.permute.xlu0 %2396
        %2398 = vrot.lane.b32.xlu0 %v1755, 64
        %v2399 = vpop.permute.xlu0 %2398
        %2404 = vrot.lane.b32.xlu0 %v1954, 80
        %v2405 = vpop.permute.xlu0 %2404
        %2406 = vrot.lane.b32.xlu0 %v1959, 80
        %v2407 = vpop.permute.xlu0 %2406
        %2412 = vrot.lane.b32.xlu0 %v2158, 96
        %v2413 = vpop.permute.xlu0 %2412
        %2414 = vrot.lane.b32.xlu0 %v2163, 96
        %v2415 = vpop.permute.xlu0 %2414
        %2420 = vrot.lane.b32.xlu0 %v2362, 112
        %v2421 = vpop.permute.xlu0 %2420
        %2422 = vrot.lane.b32.xlu0 %v2367, 112
        %v2423 = vpop.permute.xlu0 %2422
        %v2426 = vsel %vm743, %v932, %v2373
        %v2427 = vsel %vm743, %v937, %v2375
        %vm2428 = vcmask 261120
        %v2429 = vsel %vm2428, %v2426, %v2381
        %v2430 = vsel %vm2428, %v2427, %v2383
        %vm2431 = vcmask 392192
        %v2432 = vsel %vm2431, %v2429, %v2389
        %v2433 = vsel %vm2431, %v2430, %v2391
        %vm2434 = vcmask 523264
        %v2435 = vsel %vm2434, %v2432, %v2397
        %v2436 = vsel %vm2434, %v2433, %v2399
        %vm2437 = vcmask 654336
        %v2438 = vsel %vm2437, %v2435, %v2405
        %v2439 = vsel %vm2437, %v2436, %v2407
        %vm2440 = vcmask 785408
        %v2441 = vsel %vm2440, %v2438, %v2413
        %v2442 = vsel %vm2440, %v2439, %v2415
        %vm2443 = vcmask 916480
        %v2444 = vsel %vm2443, %v2441, %v2421
        %v2445 = vsel %vm2443, %v2442, %v2423
        %v2446 = vld [vmem:[#allocation11] sm:$0xff]
        %v2447 = vld [vmem:[#allocation11 + $0x8] sm:$0xff]
        %v2448 = vld [vmem:[#allocation11 + $0x10] sm:$0xff]
        %v2449 = vld [vmem:[#allocation11 + $0x18] sm:$0xff]
        %v2450 = vld [vmem:[#allocation11 + $0x20] sm:$0xff]
        %v2451 = vld [vmem:[#allocation11 + $0x28] sm:$0xff]
        %v2452 = vld [vmem:[#allocation11 + $0x30] sm:$0xff]
        %v2453 = vld [vmem:[#allocation11 + $0x38] sm:$0xff]
        %v2454 = vld [vmem:[#allocation11 + $0x40] sm:$0xff]
        %v2455 = vld [vmem:[#allocation11 + $0x48] sm:$0xff]
        %v2456 = vld [vmem:[#allocation11 + $0x50] sm:$0xff]
        %v2457 = vld [vmem:[#allocation11 + $0x58] sm:$0xff]
        %v2458 = vld [vmem:[#allocation11 + $0x60] sm:$0xff]
        %v2459 = vld [vmem:[#allocation11 + $0x68] sm:$0xff]
        %v2460 = vld [vmem:[#allocation11 + $0x70] sm:$0xff]
        %v2461 = vld [vmem:[#allocation11 + $0x78] sm:$0xff]
        %2462 = vmatprep.subr.mxu0 0.0
        %2463 = vmatpush1.msra.mxu0 %v2461
        %2464 = vmatprep.subr.mxu0 0.0
        %2465 = vmatpush1.msra.mxu0 %v2460
        %2466 = vmatprep.subr.mxu0 0.0
        %2467 = vmatpush1.msra.mxu0 %v2459
        %2468 = vmatprep.subr.mxu0 0.0
        %2469 = vmatpush1.msra.mxu0 %v2458
        %2470 = vmatprep.subr.mxu0 0.0
        %2471 = vmatpush1.msra.mxu0 %v2457
        %2472 = vmatprep.subr.mxu0 0.0
        %2473 = vmatpush1.msra.mxu0 %v2456
        %2474 = vmatprep.subr.mxu0 0.0
        %2475 = vmatpush1.msra.mxu0 %v2455
        %2476 = vmatprep.subr.mxu0 0.0
        %2477 = vmatpush1.msra.mxu0 %v2454
        %2478 = vmatprep.subr.mxu0 0.0
        %2479 = vmatpush1.msra.mxu0 %v2453
        %2480 = vmatprep.subr.mxu0 0.0
        %2481 = vmatpush1.msra.mxu0 %v2452
        %2482 = vmatprep.subr.mxu0 0.0
        %2483 = vmatpush1.msra.mxu0 %v2451
        %2484 = vmatprep.subr.mxu0 0.0
        %2485 = vmatpush1.msra.mxu0 %v2450
        %2486 = vmatprep.subr.mxu0 0.0
        %2487 = vmatpush1.msra.mxu0 %v2449
        %2488 = vmatprep.subr.mxu0 0.0
        %2489 = vmatpush1.msra.mxu0 %v2448
        %2490 = vmatprep.subr.mxu0 0.0
        %2491 = vmatpush1.msra.mxu0 %v2447
        %2492 = vmatprep.subr.mxu0 0.0
        %2493 = vmatpush1.msra.mxu0 %v2446
        %2494 = vmatprep.subr.mxu0 0.0
        %2495 = vmatpush2.msra.mxu0 0.0
        %2496 = vmatprep.subr.mxu0 0.0
        %2497 = vmatpush2.msra.mxu0 0.0
        %2498 = vmatprep.subr.mxu0 0.0
        %2499 = vmatpush2.msra.mxu0 0.0
        %2500 = vmatprep.subr.mxu0 0.0
        %2501 = vmatpush2.msra.mxu0 0.0
        %2502 = vmatprep.subr.mxu0 0.0
        %2503 = vmatpush2.msra.mxu0 0.0
        %2504 = vmatprep.subr.mxu0 0.0
        %2505 = vmatpush2.msra.mxu0 0.0
        %2506 = vmatprep.subr.mxu0 0.0
        %2507 = vmatpush2.msra.mxu0 0.0
        %2508 = vmatprep.subr.mxu0 0.0
        %2509 = vmatpush2.msra.mxu0 0.0
        %2510 = vmatprep.subr.mxu0 0.0
        %2511 = vmatpush2.msra.mxu0 0.0
        %2512 = vmatprep.subr.mxu0 0.0
        %2513 = vmatpush2.msra.mxu0 0.0
        %2514 = vmatprep.subr.mxu0 0.0
        %2515 = vmatpush2.msra.mxu0 0.0
        %2516 = vmatprep.subr.mxu0 0.0
        %2517 = vmatpush2.msra.mxu0 0.0
        %2518 = vmatprep.subr.mxu0 0.0
        %2519 = vmatpush2.msra.mxu0 0.0
        %2520 = vmatprep.subr.mxu0 0.0
        %2521 = vmatpush2.msra.mxu0 0.0
        %2522 = vmatprep.subr.mxu0 0.0
        %2523 = vmatpush2.msra.mxu0 0.0
        %2524 = vmatprep.subr.mxu0 0.0
        %2525 = vmatpush2.msra.mxu0 0.0
        %2526 = vmatprep.mubr.f32.mxu0 0.0
        %2527 = vmatmul.mubr.f32.gmra.mxu0 %v2444
        %v2528 = vpop.f32.mrf.mxu0
        %v2529 = vadd.f32 0.0, %v2528
        %v2530 = vpop.f32.mrf.mxu0
        %2531 = vmatprep.mubr.f32.mxu0 0.0
        %2532 = vmatmul.mubr.f32.gmra.mxu0 %v2445
        %v2533 = vpop.f32.mrf.mxu0
        %v2534 = vadd.f32 0.0, %v2533
        %v2535 = vpop.f32.mrf.mxu0
        %2536 = vdwg.mxu0
        %2537 = vst [vmem:[%s451] sm:$0xff] %v2529
        %2538 = vst [vmem:[%s451 + $0x8] sm:$0xff] %v2534
        %s2539 = sand.u32 %s226, 1
        %s2540 = scalar_lea.sflag [#allocation4], %s2539
        %s2541 = sand.u32 %s226, 1
        %s2542 = smul.addr %s2541, 16
        %s2543 = scalar_lea.vmem [#allocation13], %s2542
        // Predicated region
        $region77: #{multi_head_attention_block.1} parent=51 // pred_check
          %p2544 = pneg %p236
        $region78: #{multi_head_attention_block.1} parent=51 // pred_check_branch
          %2546 = sbr.rel (%p2544) target = $region80
        $region79: #{multi_head_attention_block.1} parent=51 // pred_region
          %s2548 = ssub.s32 256, 256
          %2549 = vsyncadd %s2540, %s2548
          %s2550 = smul.addr %s30, 2
          %s2551 = smul.addr %s2550, 128
          %s2552 = scalar_lea.hbm %s8, %s2551
          %s2553 = sshll.u32 %s2543, 4
          %s2554 = int_to_ptr.vmem [resolvable:$true] %s2553
          %2559 = dma.vmem_to_hbm [thread:$0]  %s2554, 256, %s2552, %s2540, 128, 128, 8
        $region80: #{multi_head_attention_block.1} parent=51 // pred_fallthru
          _
      $region52: #{multi_head_attention_block.1} parent=5 // pred_fallthru
        _
      %p2560 = scmp.le.s32.totalorder 2, %s25
      // Predicated region
      $region81: #{multi_head_attention_block.1} parent=5 // pred_check
        %p2561 = pneg %p2560
      $region82: #{multi_head_attention_block.1} parent=5 // pred_check_branch
        %2563 = sbr.rel (%p2561) target = $region84
      $region83: #{multi_head_attention_block.1} parent=5 // pred_region
        %s2564 = ssub.s32 %s25, 2
        // Predicated region
        $region85: #{multi_head_attention_block.1} parent=83 // pred_check
          %p2565 = pneg %p242
        $region86: #{multi_head_attention_block.1} parent=83 // pred_check_branch
          %2567 = sbr.rel (%p2565) target = $region88
        $region87: #{multi_head_attention_block.1} parent=83 // pred_region
          %s2568 = sand.u32 %s227, 1
          %s2569 = scalar_lea.sflag [#allocation4], %s2568
          %s2570 = sand.u32 %s227, 1
          %s2571 = smul.addr %s2570, 16
          %s2572 = scalar_lea.vmem [#allocation13], %s2571
          %2573 = dma.done %s2569, 256
        $region88: #{multi_head_attention_block.1} parent=83 // pred_fallthru
          _
      $region84: #{multi_head_attention_block.1} parent=5 // pred_fallthru
        _
    $region6: #{multi_head_attention_block.1} parent=1 // loop_footer
      %s29 = sadd.s32 1, %s25
    $region7: #{multi_head_attention_block.1} parent=1 // loop_footer_branch
      %24 = sbr.rel target = $region3
    $region8: #{multi_head_attention_block.1} parent=1 // loop_exit
      _
    %2574 = vsyncpa [#allocation3], 1
    %s2575 = scalar_lea.sflag [#allocation3], 1
    %2576 = vsyncpa %s2575, 1
    %2577 = vsyncpa [#allocation6], 1
    %s2578 = scalar_lea.sflag [#allocation6], 1
    %2579 = vsyncpa %s2578, 1
    %2580 = vsyncpa [#allocation9], 1
    %2581 = vsyncpa [#allocation12], 1
    %2582 = vsyncpa [#allocation4], 1
    %s2583 = scalar_lea.sflag [#allocation4], 1
    %2584 = vsyncpa %s2583, 1

</llo_original>
